<compile_context>
chip_gen: v6e
topology: v6e:2x2x1
jax: 0.10.0
libtpu: 0.0.40
codegen_flags: <defaults>
</compile_context>

<pallas_src>
import numpy as np
import jax
import jax.numpy as jnp
from jax import lax
from jax.experimental import pallas as pl
from jax.experimental.pallas import tpu as pltpu


def _round_up(v, m):
    return ((v + m - 1) // m) * m


def rnn_forward(x, w_ih, w_hh, b_gates, w_lin, b_lin):
    """x: (T, B, D) f32.  Weights stored transposed (in_dim, 4H)/(H, 4H)/(H, O).

    Returns (B, out_dim) f32, matching LSTM -> last step -> Linear -> *100.
    """
    T, B, D = x.shape
    H = w_hh.shape[0]
    O = w_lin.shape[1]

    Hp = _round_up(max(H, 1), 128)   # lane-aligned per-gate slab width
    Bp = _round_up(max(B, 1), 8)     # full sublane tile for the batch dim
    Op = _round_up(max(O, 1), 128)   # lane-dense output
    G = 4 * Hp

    # ---- Parameter re-layout / padding (wrapper-side, one-time) -------------
    def pad_gate_cols(w):
        # (..., 4H) -> (..., 4, H) -> zero-pad H -> Hp -> (..., 4*Hp)
        w4 = w.reshape(w.shape[:-1] + (4, H))
        w4 = jnp.pad(w4, [(0, 0)] * (w4.ndim - 1) + [(0, Hp - H)])
        return w4.reshape(w.shape[:-1] + (4 * Hp,))

    w_ih_p = pad_gate_cols(w_ih).astype(jnp.bfloat16)                       # (D, 4Hp)
    w_hh_p = pad_gate_cols(
        jnp.pad(w_hh, ((0, Hp - H), (0, 0)))).astype(jnp.bfloat16)          # (Hp, 4Hp)
    b_p = pad_gate_cols(b_gates).astype(jnp.float32)                        # (1, 4Hp)
    w_lin_p = jnp.pad(w_lin, ((0, Hp - H), (0, Op - O))).astype(jnp.bfloat16)  # (Hp, Op)
    b_lin_p = jnp.pad(b_lin, ((0, 0), (0, Op - O))).astype(jnp.float32)     # (1, Op)

    # Pad batch and flatten time*batch so the hoisted input projection is one
    # big (T*Bp, D) @ (D, 4Hp) matmul.
    x_p = jnp.zeros((T, Bp, D), jnp.bfloat16).at[:, :B, :].set(
        x.astype(jnp.bfloat16))
    x2d = x_p.reshape(T * Bp, D)

    def kernel(x_ref, wih_ref, whh_ref, b_ref, wlin_ref, blin_ref,
               out_ref, pre_scr):
        # -- Prologue: hoisted input projection for all T steps, bias folded in.
        pre_scr[...] = (
            jnp.dot(x_ref[...], wih_ref[...],
                    preferred_element_type=jnp.float32)
            + b_ref[...])                                     # (T*Bp, 4Hp) f32

        w_hh_v = whh_ref[...]          # (Hp, 4Hp) bf16, resident across the loop
        w_lin_v = wlin_ref[...]        # (Hp, Op)  bf16

        # -- Serial recurrence, fully unrolled in-kernel (no grid overhead).
        def step(t, carry):
            h, c = carry               # (Bp, Hp) f32 each
            row0 = pl.multiple_of(t * Bp, Bp)
            gates = (pre_scr[pl.ds(row0, Bp), :]
                     + jnp.dot(h.astype(jnp.bfloat16), w_hh_v,
                               preferred_element_type=jnp.float32))  # (Bp, 4Hp)
            # PyTorch gate order [i, f, g, o]; each slice is a 128-lane slab.
            i_g = jax.nn.sigmoid(gates[:, 0 * Hp:1 * Hp])
            f_g = jax.nn.sigmoid(gates[:, 1 * Hp:2 * Hp])
            g_g = jnp.tanh(gates[:, 2 * Hp:3 * Hp])
            o_g = jax.nn.sigmoid(gates[:, 3 * Hp:4 * Hp])
            c_new = f_g * c + i_g * g_g
            h_new = o_g * jnp.tanh(c_new)
            return h_new, c_new

        h0 = jnp.zeros((Bp, Hp), jnp.float32)
        c0 = jnp.zeros((Bp, Hp), jnp.float32)
        h_last, _ = lax.fori_loop(0, T, step, (h0, c0), unroll=True)

        # -- Final Linear on the last hidden state, *100, lane-dense store.
        out_ref[...] = (jnp.dot(h_last.astype(jnp.bfloat16), w_lin_v,
                                preferred_element_type=jnp.float32)
                        + blin_ref[...]) * 100.0

    out_p = pl.pallas_call(
        kernel,
        out_shape=jax.ShapeDtypeStruct((Bp, Op), jnp.float32),
        grid_spec=pltpu.PrefetchScalarGridSpec(
            num_scalar_prefetch=0,
            grid=(1,),
            in_specs=[
                pl.BlockSpec((T * Bp, D), lambda i: (0, 0)),   # x, all steps
                pl.BlockSpec((D, G), lambda i: (0, 0)),        # W_ih^T (bf16)
                pl.BlockSpec((Hp, G), lambda i: (0, 0)),       # W_hh^T (bf16)
                pl.BlockSpec((1, G), lambda i: (0, 0)),        # b_ih + b_hh
                pl.BlockSpec((Hp, Op), lambda i: (0, 0)),      # linear W^T (bf16)
                pl.BlockSpec((1, Op), lambda i: (0, 0)),       # linear b
            ],
            out_specs=pl.BlockSpec((Bp, Op), lambda i: (0, 0)),
            scratch_shapes=[
                pltpu.VMEM((T * Bp, G), jnp.float32),          # precomputed gates
            ],
        ),
        compiler_params=pltpu.CompilerParams(
            dimension_semantics=("arbitrary",)),
    )(x2d, w_ih_p, w_hh_p, b_p, w_lin_p, b_lin_p)

    return out_p[:B, :O]


def rnn_forward_ref(x, w_ih, w_hh, b_gates, w_lin, b_lin):
    """Pure-JAX f32 reference (same math as the PyTorch module)."""
    T, B, D = x.shape
    H = w_hh.shape[0]

    def step(carry, x_t):
        h, c = carry
        gates = x_t @ w_ih + h @ w_hh + b_gates
        i_g = jax.nn.sigmoid(gates[:, 0 * H:1 * H])
        f_g = jax.nn.sigmoid(gates[:, 1 * H:2 * H])
        g_g = jnp.tanh(gates[:, 2 * H:3 * H])
        o_g = jax.nn.sigmoid(gates[:, 3 * H:4 * H])
        c_new = f_g * c + i_g * g_g
        h_new = o_g * jnp.tanh(c_new)
        return (h_new, c_new), None

    h0 = jnp.zeros((B, H), jnp.float32)
    c0 = jnp.zeros((B, H), jnp.float32)
    (h_last, _), _ = lax.scan(step, (h0, c0), x)
    return (h_last @ w_lin + b_lin) * 100.0


if __name__ == "__main__":
    # Small shapes consistent with the module: seq=8, batch=2, input_dim=16,
    # hidden_dim=32, num_layers=1, num_dir=1, out_dim=10.
    T, B, D, H, O = 8, 2, 16, 32, 10

    key = jax.random.PRNGKey(0)
    kx, k1, k2, k3, k4, k5, k6 = jax.random.split(key, 7)

    # PyTorch-style uniform(-1/sqrt(H), 1/sqrt(H)) init, deterministic.
    bound = 1.0 / np.sqrt(H)
    x = jax.random.normal(kx, (T, B, D), jnp.float32)
    w_ih = jax.random.uniform(k1, (D, 4 * H), jnp.float32, -bound, bound)   # weight_ih_l0^T
    w_hh = jax.random.uniform(k2, (H, 4 * H), jnp.float32, -bound, bound)   # weight_hh_l0^T
    b_ih = jax.random.uniform(k3, (1, 4 * H), jnp.float32, -bound, bound)
    b_hh = jax.random.uniform(k4, (1, 4 * H), jnp.float32, -bound, bound)
    b_gates = b_ih + b_hh
    lin_bound = 1.0 / np.sqrt(H)  # linear in_features = hidden_dim * num_dir
    w_lin = jax.random.uniform(k5, (H, O), jnp.float32, -lin_bound, lin_bound)
    b_lin = jax.random.uniform(k6, (1, O), jnp.float32, -lin_bound, lin_bound)

    out = jax.block_until_ready(
        rnn_forward(x, w_ih, w_hh, b_gates, w_lin, b_lin))
    ref = jax.block_until_ready(
        rnn_forward_ref(x, w_ih, w_hh, b_gates, w_lin, b_lin))

    # Kernel uses bf16 matmul operands with f32 accumulation; the reference is
    # full f32, and the output is scaled by 100, so allow a slightly larger atol.
    np.testing.assert_allclose(np.asarray(out), np.asarray(ref),
                               rtol=5e-2, atol=1.0)
    print("KERNEL_OK")
</pallas_src>

<mosaic_0001>
module attributes {stable_mosaic.version = 11 : i64} {
  func.func @kernel(%arg0: i32, %arg1: memref<64x16xbf16, #tpu.memory_space<vmem>>, %arg2: memref<16x512xbf16, #tpu.memory_space<vmem>>, %arg3: memref<128x512xbf16, #tpu.memory_space<vmem>>, %arg4: memref<1x512xf32, #tpu.memory_space<vmem>>, %arg5: memref<128x128xbf16, #tpu.memory_space<vmem>>, %arg6: memref<1x128xf32, #tpu.memory_space<vmem>>, %arg7: memref<8x128xf32, #tpu.memory_space<vmem>>, %arg8: memref<64x512xf32, #tpu.memory_space<vmem>>) attributes {dimension_semantics = [#tpu.dimension_semantics<arbitrary>], iteration_bounds = array<i64: 1>, scalar_prefetch = 0 : i64, scratch_operands = 1 : i64, tpu.core_type = #tpu.core_type<tc>, window_params = [{pipeline_mode = #tpu.pipeline_mode<synchronous>, transform_indices = @transform_0, window_bounds = array<i64: 64, 16>}, {pipeline_mode = #tpu.pipeline_mode<synchronous>, transform_indices = @transform_1, window_bounds = array<i64: 16, 512>}, {pipeline_mode = #tpu.pipeline_mode<synchronous>, transform_indices = @transform_2, window_bounds = array<i64: 128, 512>}, {pipeline_mode = #tpu.pipeline_mode<synchronous>, transform_indices = @transform_3, window_bounds = array<i64: 1, 512>}, {pipeline_mode = #tpu.pipeline_mode<synchronous>, transform_indices = @transform_4, window_bounds = array<i64: 128, 128>}, {pipeline_mode = #tpu.pipeline_mode<synchronous>, transform_indices = @transform_5, window_bounds = array<i64: 1, 128>}, {pipeline_mode = #tpu.pipeline_mode<synchronous>, transform_indices = @transform_6, window_bounds = array<i64: 8, 128>}]} {
    %c0 = arith.constant 0 : index
    %c0_0 = arith.constant 0 : index
    %0 = vector.load %arg1[%c0, %c0_0] : memref<64x16xbf16, #tpu.memory_space<vmem>>, vector<64x16xbf16>
    %c0_1 = arith.constant 0 : index
    %c0_2 = arith.constant 0 : index
    %1 = vector.load %arg2[%c0_1, %c0_2] : memref<16x512xbf16, #tpu.memory_space<vmem>>, vector<16x512xbf16>
    %cst = arith.constant dense<0.000000e+00> : vector<64x512xf32>
    %2 = tpu.matmul %0, %1, %cst {dimension_numbers = #tpu.dot_dimension_numbers<[1], [0], [0], [1], [0, 0, 1, 1], [], []>} : vector<64x16xbf16>, vector<16x512xbf16>, vector<64x512xf32> -> vector<64x512xf32>
    %c0_3 = arith.constant 0 : index
    %c0_4 = arith.constant 0 : index
    %3 = vector.load %arg4[%c0_3, %c0_4] : memref<1x512xf32, #tpu.memory_space<vmem>>, vector<1x512xf32>
    %4 = vector.broadcast %3 : vector<1x512xf32> to vector<64x512xf32>
    %5 = arith.addf %2, %4 : vector<64x512xf32>
    %c0_5 = arith.constant 0 : index
    %c0_6 = arith.constant 0 : index
    %6 = vector.load %arg8[%c0_5, %c0_6] : memref<64x512xf32, #tpu.memory_space<vmem>>, vector<64x512xf32>
    tpu.vector_store %arg8[%c0_5, %c0_6], %5 {strides = array<i32>} : memref<64x512xf32, #tpu.memory_space<vmem>>, vector<64x512xf32>,
    %c0_7 = arith.constant 0 : index
    %c0_8 = arith.constant 0 : index
    %7 = vector.load %arg3[%c0_7, %c0_8] : memref<128x512xbf16, #tpu.memory_space<vmem>>, vector<128x512xbf16>
    %c0_9 = arith.constant 0 : index
    %c0_10 = arith.constant 0 : index
    %8 = vector.load %arg5[%c0_9, %c0_10] : memref<128x128xbf16, #tpu.memory_space<vmem>>, vector<128x128xbf16>
    %cst_11 = arith.constant 0.000000e+00 : f32
    %9 = vector.broadcast %cst_11 : f32 to vector<8x128xf32>
    %cst_12 = arith.constant 0.000000e+00 : f32
    %10 = vector.broadcast %cst_12 : f32 to vector<8x128xf32>
    %c0_i32 = arith.constant 0 : i32
    %c8_i32 = arith.constant 8 : i32
    %11 = arith.muli %c0_i32, %c8_i32 : i32
    %12 = tpu.assume_multiple %11, 8 : i32
    %13 = arith.index_cast %12 : i32 to index
    %c0_13 = arith.constant 0 : index
    %14 = vector.load %arg8[%13, %c0_13] : memref<64x512xf32, #tpu.memory_space<vmem>>, vector<8x512xf32>
    %15 = arith.truncf %9 : vector<8x128xf32> to vector<8x128xbf16>
    %cst_14 = arith.constant dense<0.000000e+00> : vector<8x512xf32>
    %16 = tpu.matmul %15, %7, %cst_14 {dimension_numbers = #tpu.dot_dimension_numbers<[1], [0], [0], [1], [0, 0, 1, 1], [], []>} : vector<8x128xbf16>, vector<128x512xbf16>, vector<8x512xf32> -> vector<8x512xf32>
    %17 = arith.addf %14, %16 : vector<8x512xf32>
    %18 = vector.extract_strided_slice %17 {offsets = [0, 0], sizes = [8, 128], strides = [1, 1]} : vector<8x512xf32> to vector<8x128xf32>
    %19 = arith.negf %18 : vector<8x128xf32>
    %20 = math.exp %19 : vector<8x128xf32>
    %cst_15 = arith.constant 1.000000e+00 : f32
    %21 = vector.broadcast %cst_15 : f32 to vector<8x128xf32>
    %22 = arith.addf %21, %20 : vector<8x128xf32>
    %23 = arith.divf %21, %22 : vector<8x128xf32>
    %24 = vector.extract_strided_slice %17 {offsets = [0, 128], sizes = [8, 128], strides = [1, 1]} : vector<8x512xf32> to vector<8x128xf32>
    %25 = arith.negf %24 : vector<8x128xf32>
    %26 = math.exp %25 : vector<8x128xf32>
    %cst_16 = arith.constant 1.000000e+00 : f32
    %27 = vector.broadcast %cst_16 : f32 to vector<8x128xf32>
    %28 = arith.addf %27, %26 : vector<8x128xf32>
    %29 = arith.divf %27, %28 : vector<8x128xf32>
    %30 = vector.extract_strided_slice %17 {offsets = [0, 256], sizes = [8, 128], strides = [1, 1]} : vector<8x512xf32> to vector<8x128xf32>
    %31 = math.tanh %30 : vector<8x128xf32>
    %32 = vector.extract_strided_slice %17 {offsets = [0, 384], sizes = [8, 128], strides = [1, 1]} : vector<8x512xf32> to vector<8x128xf32>
    %33 = arith.negf %32 : vector<8x128xf32>
    %34 = math.exp %33 : vector<8x128xf32>
    %cst_17 = arith.constant 1.000000e+00 : f32
    %35 = vector.broadcast %cst_17 : f32 to vector<8x128xf32>
    %36 = arith.addf %35, %34 : vector<8x128xf32>
    %37 = arith.divf %35, %36 : vector<8x128xf32>
    %38 = arith.mulf %29, %10 : vector<8x128xf32>
    %39 = arith.mulf %23, %31 : vector<8x128xf32>
    %40 = arith.addf %38, %39 : vector<8x128xf32>
    %41 = math.tanh %40 : vector<8x128xf32>
    %42 = arith.mulf %37, %41 : vector<8x128xf32>
    %c1_i32 = arith.constant 1 : i32
    %c8_i32_18 = arith.constant 8 : i32
    %43 = arith.muli %c1_i32, %c8_i32_18 : i32
    %44 = tpu.assume_multiple %43, 8 : i32
    %45 = arith.index_cast %44 : i32 to index
    %c0_19 = arith.constant 0 : index
    %46 = vector.load %arg8[%45, %c0_19] : memref<64x512xf32, #tpu.memory_space<vmem>>, vector<8x512xf32>
    %47 = arith.truncf %42 : vector<8x128xf32> to vector<8x128xbf16>
    %cst_20 = arith.constant dense<0.000000e+00> : vector<8x512xf32>
    %48 = tpu.matmul %47, %7, %cst_20 {dimension_numbers = #tpu.dot_dimension_numbers<[1], [0], [0], [1], [0, 0, 1, 1], [], []>} : vector<8x128xbf16>, vector<128x512xbf16>, vector<8x512xf32> -> vector<8x512xf32>
    %49 = arith.addf %46, %48 : vector<8x512xf32>
    %50 = vector.extract_strided_slice %49 {offsets = [0, 0], sizes = [8, 128], strides = [1, 1]} : vector<8x512xf32> to vector<8x128xf32>
    %51 = arith.negf %50 : vector<8x128xf32>
    %52 = math.exp %51 : vector<8x128xf32>
    %cst_21 = arith.constant 1.000000e+00 : f32
    %53 = vector.broadcast %cst_21 : f32 to vector<8x128xf32>
    %54 = arith.addf %53, %52 : vector<8x128xf32>
    %55 = arith.divf %53, %54 : vector<8x128xf32>
    %56 = vector.extract_strided_slice %49 {offsets = [0, 128], sizes = [8, 128], strides = [1, 1]} : vector<8x512xf32> to vector<8x128xf32>
    %57 = arith.negf %56 : vector<8x128xf32>
    %58 = math.exp %57 : vector<8x128xf32>
    %cst_22 = arith.constant 1.000000e+00 : f32
    %59 = vector.broadcast %cst_22 : f32 to vector<8x128xf32>
    %60 = arith.addf %59, %58 : vector<8x128xf32>
    %61 = arith.divf %59, %60 : vector<8x128xf32>
    %62 = vector.extract_strided_slice %49 {offsets = [0, 256], sizes = [8, 128], strides = [1, 1]} : vector<8x512xf32> to vector<8x128xf32>
    %63 = math.tanh %62 : vector<8x128xf32>
    %64 = vector.extract_strided_slice %49 {offsets = [0, 384], sizes = [8, 128], strides = [1, 1]} : vector<8x512xf32> to vector<8x128xf32>
    %65 = arith.negf %64 : vector<8x128xf32>
    %66 = math.exp %65 : vector<8x128xf32>
    %cst_23 = arith.constant 1.000000e+00 : f32
    %67 = vector.broadcast %cst_23 : f32 to vector<8x128xf32>
    %68 = arith.addf %67, %66 : vector<8x128xf32>
    %69 = arith.divf %67, %68 : vector<8x128xf32>
    %70 = arith.mulf %61, %40 : vector<8x128xf32>
    %71 = arith.mulf %55, %63 : vector<8x128xf32>
    %72 = arith.addf %70, %71 : vector<8x128xf32>
    %73 = math.tanh %72 : vector<8x128xf32>
    %74 = arith.mulf %69, %73 : vector<8x128xf32>
    %c2_i32 = arith.constant 2 : i32
    %c8_i32_24 = arith.constant 8 : i32
    %75 = arith.muli %c2_i32, %c8_i32_24 : i32
    %76 = tpu.assume_multiple %75, 8 : i32
    %77 = arith.index_cast %76 : i32 to index
    %c0_25 = arith.constant 0 : index
    %78 = vector.load %arg8[%77, %c0_25] : memref<64x512xf32, #tpu.memory_space<vmem>>, vector<8x512xf32>
    %79 = arith.truncf %74 : vector<8x128xf32> to vector<8x128xbf16>
    %cst_26 = arith.constant dense<0.000000e+00> : vector<8x512xf32>
    %80 = tpu.matmul %79, %7, %cst_26 {dimension_numbers = #tpu.dot_dimension_numbers<[1], [0], [0], [1], [0, 0, 1, 1], [], []>} : vector<8x128xbf16>, vector<128x512xbf16>, vector<8x512xf32> -> vector<8x512xf32>
    %81 = arith.addf %78, %80 : vector<8x512xf32>
    %82 = vector.extract_strided_slice %81 {offsets = [0, 0], sizes = [8, 128], strides = [1, 1]} : vector<8x512xf32> to vector<8x128xf32>
    %83 = arith.negf %82 : vector<8x128xf32>
    %84 = math.exp %83 : vector<8x128xf32>
    %cst_27 = arith.constant 1.000000e+00 : f32
    %85 = vector.broadcast %cst_27 : f32 to vector<8x128xf32>
    %86 = arith.addf %85, %84 : vector<8x128xf32>
    %87 = arith.divf %85, %86 : vector<8x128xf32>
    %88 = vector.extract_strided_slice %81 {offsets = [0, 128], sizes = [8, 128], strides = [1, 1]} : vector<8x512xf32> to vector<8x128xf32>
    %89 = arith.negf %88 : vector<8x128xf32>
    %90 = math.exp %89 : vector<8x128xf32>
    %cst_28 = arith.constant 1.000000e+00 : f32
    %91 = vector.broadcast %cst_28 : f32 to vector<8x128xf32>
    %92 = arith.addf %91, %90 : vector<8x128xf32>
    %93 = arith.divf %91, %92 : vector<8x128xf32>
    %94 = vector.extract_strided_slice %81 {offsets = [0, 256], sizes = [8, 128], strides = [1, 1]} : vector<8x512xf32> to vector<8x128xf32>
    %95 = math.tanh %94 : vector<8x128xf32>
    %96 = vector.extract_strided_slice %81 {offsets = [0, 384], sizes = [8, 128], strides = [1, 1]} : vector<8x512xf32> to vector<8x128xf32>
    %97 = arith.negf %96 : vector<8x128xf32>
    %98 = math.exp %97 : vector<8x128xf32>
    %cst_29 = arith.constant 1.000000e+00 : f32
    %99 = vector.broadcast %cst_29 : f32 to vector<8x128xf32>
    %100 = arith.addf %99, %98 : vector<8x128xf32>
    %101 = arith.divf %99, %100 : vector<8x128xf32>
    %102 = arith.mulf %93, %72 : vector<8x128xf32>
    %103 = arith.mulf %87, %95 : vector<8x128xf32>
    %104 = arith.addf %102, %103 : vector<8x128xf32>
    %105 = math.tanh %104 : vector<8x128xf32>
    %106 = arith.mulf %101, %105 : vector<8x128xf32>
    %c3_i32 = arith.constant 3 : i32
    %c8_i32_30 = arith.constant 8 : i32
    %107 = arith.muli %c3_i32, %c8_i32_30 : i32
    %108 = tpu.assume_multiple %107, 8 : i32
    %109 = arith.index_cast %108 : i32 to index
    %c0_31 = arith.constant 0 : index
    %110 = vector.load %arg8[%109, %c0_31] : memref<64x512xf32, #tpu.memory_space<vmem>>, vector<8x512xf32>
    %111 = arith.truncf %106 : vector<8x128xf32> to vector<8x128xbf16>
    %cst_32 = arith.constant dense<0.000000e+00> : vector<8x512xf32>
    %112 = tpu.matmul %111, %7, %cst_32 {dimension_numbers = #tpu.dot_dimension_numbers<[1], [0], [0], [1], [0, 0, 1, 1], [], []>} : vector<8x128xbf16>, vector<128x512xbf16>, vector<8x512xf32> -> vector<8x512xf32>
    %113 = arith.addf %110, %112 : vector<8x512xf32>
    %114 = vector.extract_strided_slice %113 {offsets = [0, 0], sizes = [8, 128], strides = [1, 1]} : vector<8x512xf32> to vector<8x128xf32>
    %115 = arith.negf %114 : vector<8x128xf32>
    %116 = math.exp %115 : vector<8x128xf32>
    %cst_33 = arith.constant 1.000000e+00 : f32
    %117 = vector.broadcast %cst_33 : f32 to vector<8x128xf32>
    %118 = arith.addf %117, %116 : vector<8x128xf32>
    %119 = arith.divf %117, %118 : vector<8x128xf32>
    %120 = vector.extract_strided_slice %113 {offsets = [0, 128], sizes = [8, 128], strides = [1, 1]} : vector<8x512xf32> to vector<8x128xf32>
    %121 = arith.negf %120 : vector<8x128xf32>
    %122 = math.exp %121 : vector<8x128xf32>
    %cst_34 = arith.constant 1.000000e+00 : f32
    %123 = vector.broadcast %cst_34 : f32 to vector<8x128xf32>
    %124 = arith.addf %123, %122 : vector<8x128xf32>
    %125 = arith.divf %123, %124 : vector<8x128xf32>
    %126 = vector.extract_strided_slice %113 {offsets = [0, 256], sizes = [8, 128], strides = [1, 1]} : vector<8x512xf32> to vector<8x128xf32>
    %127 = math.tanh %126 : vector<8x128xf32>
    %128 = vector.extract_strided_slice %113 {offsets = [0, 384], sizes = [8, 128], strides = [1, 1]} : vector<8x512xf32> to vector<8x128xf32>
    %129 = arith.negf %128 : vector<8x128xf32>
    %130 = math.exp %129 : vector<8x128xf32>
    %cst_35 = arith.constant 1.000000e+00 : f32
    %131 = vector.broadcast %cst_35 : f32 to vector<8x128xf32>
    %132 = arith.addf %131, %130 : vector<8x128xf32>
    %133 = arith.divf %131, %132 : vector<8x128xf32>
    %134 = arith.mulf %125, %104 : vector<8x128xf32>
    %135 = arith.mulf %119, %127 : vector<8x128xf32>
    %136 = arith.addf %134, %135 : vector<8x128xf32>
    %137 = math.tanh %136 : vector<8x128xf32>
    %138 = arith.mulf %133, %137 : vector<8x128xf32>
    %c4_i32 = arith.constant 4 : i32
    %c8_i32_36 = arith.constant 8 : i32
    %139 = arith.muli %c4_i32, %c8_i32_36 : i32
    %140 = tpu.assume_multiple %139, 8 : i32
    %141 = arith.index_cast %140 : i32 to index
    %c0_37 = arith.constant 0 : index
    %142 = vector.load %arg8[%141, %c0_37] : memref<64x512xf32, #tpu.memory_space<vmem>>, vector<8x512xf32>
    %143 = arith.truncf %138 : vector<8x128xf32> to vector<8x128xbf16>
    %cst_38 = arith.constant dense<0.000000e+00> : vector<8x512xf32>
    %144 = tpu.matmul %143, %7, %cst_38 {dimension_numbers = #tpu.dot_dimension_numbers<[1], [0], [0], [1], [0, 0, 1, 1], [], []>} : vector<8x128xbf16>, vector<128x512xbf16>, vector<8x512xf32> -> vector<8x512xf32>
    %145 = arith.addf %142, %144 : vector<8x512xf32>
    %146 = vector.extract_strided_slice %145 {offsets = [0, 0], sizes = [8, 128], strides = [1, 1]} : vector<8x512xf32> to vector<8x128xf32>
    %147 = arith.negf %146 : vector<8x128xf32>
    %148 = math.exp %147 : vector<8x128xf32>
    %cst_39 = arith.constant 1.000000e+00 : f32
    %149 = vector.broadcast %cst_39 : f32 to vector<8x128xf32>
    %150 = arith.addf %149, %148 : vector<8x128xf32>
    %151 = arith.divf %149, %150 : vector<8x128xf32>
    %152 = vector.extract_strided_slice %145 {offsets = [0, 128], sizes = [8, 128], strides = [1, 1]} : vector<8x512xf32> to vector<8x128xf32>
    %153 = arith.negf %152 : vector<8x128xf32>
    %154 = math.exp %153 : vector<8x128xf32>
    %cst_40 = arith.constant 1.000000e+00 : f32
    %155 = vector.broadcast %cst_40 : f32 to vector<8x128xf32>
    %156 = arith.addf %155, %154 : vector<8x128xf32>
    %157 = arith.divf %155, %156 : vector<8x128xf32>
    %158 = vector.extract_strided_slice %145 {offsets = [0, 256], sizes = [8, 128], strides = [1, 1]} : vector<8x512xf32> to vector<8x128xf32>
    %159 = math.tanh %158 : vector<8x128xf32>
    %160 = vector.extract_strided_slice %145 {offsets = [0, 384], sizes = [8, 128], strides = [1, 1]} : vector<8x512xf32> to vector<8x128xf32>
    %161 = arith.negf %160 : vector<8x128xf32>
    %162 = math.exp %161 : vector<8x128xf32>
    %cst_41 = arith.constant 1.000000e+00 : f32
    %163 = vector.broadcast %cst_41 : f32 to vector<8x128xf32>
    %164 = arith.addf %163, %162 : vector<8x128xf32>
    %165 = arith.divf %163, %164 : vector<8x128xf32>
    %166 = arith.mulf %157, %136 : vector<8x128xf32>
    %167 = arith.mulf %151, %159 : vector<8x128xf32>
    %168 = arith.addf %166, %167 : vector<8x128xf32>
    %169 = math.tanh %168 : vector<8x128xf32>
    %170 = arith.mulf %165, %169 : vector<8x128xf32>
    %c5_i32 = arith.constant 5 : i32
    %c8_i32_42 = arith.constant 8 : i32
    %171 = arith.muli %c5_i32, %c8_i32_42 : i32
    %172 = tpu.assume_multiple %171, 8 : i32
    %173 = arith.index_cast %172 : i32 to index
    %c0_43 = arith.constant 0 : index
    %174 = vector.load %arg8[%173, %c0_43] : memref<64x512xf32, #tpu.memory_space<vmem>>, vector<8x512xf32>
    %175 = arith.truncf %170 : vector<8x128xf32> to vector<8x128xbf16>
    %cst_44 = arith.constant dense<0.000000e+00> : vector<8x512xf32>
    %176 = tpu.matmul %175, %7, %cst_44 {dimension_numbers = #tpu.dot_dimension_numbers<[1], [0], [0], [1], [0, 0, 1, 1], [], []>} : vector<8x128xbf16>, vector<128x512xbf16>, vector<8x512xf32> -> vector<8x512xf32>
    %177 = arith.addf %174, %176 : vector<8x512xf32>
    %178 = vector.extract_strided_slice %177 {offsets = [0, 0], sizes = [8, 128], strides = [1, 1]} : vector<8x512xf32> to vector<8x128xf32>
    %179 = arith.negf %178 : vector<8x128xf32>
    %180 = math.exp %179 : vector<8x128xf32>
    %cst_45 = arith.constant 1.000000e+00 : f32
    %181 = vector.broadcast %cst_45 : f32 to vector<8x128xf32>
    %182 = arith.addf %181, %180 : vector<8x128xf32>
    %183 = arith.divf %181, %182 : vector<8x128xf32>
    %184 = vector.extract_strided_slice %177 {offsets = [0, 128], sizes = [8, 128], strides = [1, 1]} : vector<8x512xf32> to vector<8x128xf32>
    %185 = arith.negf %184 : vector<8x128xf32>
    %186 = math.exp %185 : vector<8x128xf32>
    %cst_46 = arith.constant 1.000000e+00 : f32
    %187 = vector.broadcast %cst_46 : f32 to vector<8x128xf32>
    %188 = arith.addf %187, %186 : vector<8x128xf32>
    %189 = arith.divf %187, %188 : vector<8x128xf32>
    %190 = vector.extract_strided_slice %177 {offsets = [0, 256], sizes = [8, 128], strides = [1, 1]} : vector<8x512xf32> to vector<8x128xf32>
    %191 = math.tanh %190 : vector<8x128xf32>
    %192 = vector.extract_strided_slice %177 {offsets = [0, 384], sizes = [8, 128], strides = [1, 1]} : vector<8x512xf32> to vector<8x128xf32>
    %193 = arith.negf %192 : vector<8x128xf32>
    %194 = math.exp %193 : vector<8x128xf32>
    %cst_47 = arith.constant 1.000000e+00 : f32
    %195 = vector.broadcast %cst_47 : f32 to vector<8x128xf32>
    %196 = arith.addf %195, %194 : vector<8x128xf32>
    %197 = arith.divf %195, %196 : vector<8x128xf32>
    %198 = arith.mulf %189, %168 : vector<8x128xf32>
    %199 = arith.mulf %183, %191 : vector<8x128xf32>
    %200 = arith.addf %198, %199 : vector<8x128xf32>
    %201 = math.tanh %200 : vector<8x128xf32>
    %202 = arith.mulf %197, %201 : vector<8x128xf32>
    %c6_i32 = arith.constant 6 : i32
    %c8_i32_48 = arith.constant 8 : i32
    %203 = arith.muli %c6_i32, %c8_i32_48 : i32
    %204 = tpu.assume_multiple %203, 8 : i32
    %205 = arith.index_cast %204 : i32 to index
    %c0_49 = arith.constant 0 : index
    %206 = vector.load %arg8[%205, %c0_49] : memref<64x512xf32, #tpu.memory_space<vmem>>, vector<8x512xf32>
    %207 = arith.truncf %202 : vector<8x128xf32> to vector<8x128xbf16>
    %cst_50 = arith.constant dense<0.000000e+00> : vector<8x512xf32>
    %208 = tpu.matmul %207, %7, %cst_50 {dimension_numbers = #tpu.dot_dimension_numbers<[1], [0], [0], [1], [0, 0, 1, 1], [], []>} : vector<8x128xbf16>, vector<128x512xbf16>, vector<8x512xf32> -> vector<8x512xf32>
    %209 = arith.addf %206, %208 : vector<8x512xf32>
    %210 = vector.extract_strided_slice %209 {offsets = [0, 0], sizes = [8, 128], strides = [1, 1]} : vector<8x512xf32> to vector<8x128xf32>
    %211 = arith.negf %210 : vector<8x128xf32>
    %212 = math.exp %211 : vector<8x128xf32>
    %cst_51 = arith.constant 1.000000e+00 : f32
    %213 = vector.broadcast %cst_51 : f32 to vector<8x128xf32>
    %214 = arith.addf %213, %212 : vector<8x128xf32>
    %215 = arith.divf %213, %214 : vector<8x128xf32>
    %216 = vector.extract_strided_slice %209 {offsets = [0, 128], sizes = [8, 128], strides = [1, 1]} : vector<8x512xf32> to vector<8x128xf32>
    %217 = arith.negf %216 : vector<8x128xf32>
    %218 = math.exp %217 : vector<8x128xf32>
    %cst_52 = arith.constant 1.000000e+00 : f32
    %219 = vector.broadcast %cst_52 : f32 to vector<8x128xf32>
    %220 = arith.addf %219, %218 : vector<8x128xf32>
    %221 = arith.divf %219, %220 : vector<8x128xf32>
    %222 = vector.extract_strided_slice %209 {offsets = [0, 256], sizes = [8, 128], strides = [1, 1]} : vector<8x512xf32> to vector<8x128xf32>
    %223 = math.tanh %222 : vector<8x128xf32>
    %224 = vector.extract_strided_slice %209 {offsets = [0, 384], sizes = [8, 128], strides = [1, 1]} : vector<8x512xf32> to vector<8x128xf32>
    %225 = arith.negf %224 : vector<8x128xf32>
    %226 = math.exp %225 : vector<8x128xf32>
    %cst_53 = arith.constant 1.000000e+00 : f32
    %227 = vector.broadcast %cst_53 : f32 to vector<8x128xf32>
    %228 = arith.addf %227, %226 : vector<8x128xf32>
    %229 = arith.divf %227, %228 : vector<8x128xf32>
    %230 = arith.mulf %221, %200 : vector<8x128xf32>
    %231 = arith.mulf %215, %223 : vector<8x128xf32>
    %232 = arith.addf %230, %231 : vector<8x128xf32>
    %233 = math.tanh %232 : vector<8x128xf32>
    %234 = arith.mulf %229, %233 : vector<8x128xf32>
    %c7_i32 = arith.constant 7 : i32
    %c8_i32_54 = arith.constant 8 : i32
    %235 = arith.muli %c7_i32, %c8_i32_54 : i32
    %236 = tpu.assume_multiple %235, 8 : i32
    %237 = arith.index_cast %236 : i32 to index
    %c0_55 = arith.constant 0 : index
    %238 = vector.load %arg8[%237, %c0_55] : memref<64x512xf32, #tpu.memory_space<vmem>>, vector<8x512xf32>
    %239 = arith.truncf %234 : vector<8x128xf32> to vector<8x128xbf16>
    %cst_56 = arith.constant dense<0.000000e+00> : vector<8x512xf32>
    %240 = tpu.matmul %239, %7, %cst_56 {dimension_numbers = #tpu.dot_dimension_numbers<[1], [0], [0], [1], [0, 0, 1, 1], [], []>} : vector<8x128xbf16>, vector<128x512xbf16>, vector<8x512xf32> -> vector<8x512xf32>
    %241 = arith.addf %238, %240 : vector<8x512xf32>
    %242 = vector.extract_strided_slice %241 {offsets = [0, 0], sizes = [8, 128], strides = [1, 1]} : vector<8x512xf32> to vector<8x128xf32>
    %243 = arith.negf %242 : vector<8x128xf32>
    %244 = math.exp %243 : vector<8x128xf32>
    %cst_57 = arith.constant 1.000000e+00 : f32
    %245 = vector.broadcast %cst_57 : f32 to vector<8x128xf32>
    %246 = arith.addf %245, %244 : vector<8x128xf32>
    %247 = arith.divf %245, %246 : vector<8x128xf32>
    %248 = vector.extract_strided_slice %241 {offsets = [0, 128], sizes = [8, 128], strides = [1, 1]} : vector<8x512xf32> to vector<8x128xf32>
    %249 = arith.negf %248 : vector<8x128xf32>
    %250 = math.exp %249 : vector<8x128xf32>
    %cst_58 = arith.constant 1.000000e+00 : f32
    %251 = vector.broadcast %cst_58 : f32 to vector<8x128xf32>
    %252 = arith.addf %251, %250 : vector<8x128xf32>
    %253 = arith.divf %251, %252 : vector<8x128xf32>
    %254 = vector.extract_strided_slice %241 {offsets = [0, 256], sizes = [8, 128], strides = [1, 1]} : vector<8x512xf32> to vector<8x128xf32>
    %255 = math.tanh %254 : vector<8x128xf32>
    %256 = vector.extract_strided_slice %241 {offsets = [0, 384], sizes = [8, 128], strides = [1, 1]} : vector<8x512xf32> to vector<8x128xf32>
    %257 = arith.negf %256 : vector<8x128xf32>
    %258 = math.exp %257 : vector<8x128xf32>
    %cst_59 = arith.constant 1.000000e+00 : f32
    %259 = vector.broadcast %cst_59 : f32 to vector<8x128xf32>
    %260 = arith.addf %259, %258 : vector<8x128xf32>
    %261 = arith.divf %259, %260 : vector<8x128xf32>
    %262 = arith.mulf %253, %232 : vector<8x128xf32>
    %263 = arith.mulf %247, %255 : vector<8x128xf32>
    %264 = arith.addf %262, %263 : vector<8x128xf32>
    %265 = math.tanh %264 : vector<8x128xf32>
    %266 = arith.mulf %261, %265 : vector<8x128xf32>
    %c8_i32_60 = arith.constant 8 : i32
    %267 = arith.truncf %266 : vector<8x128xf32> to vector<8x128xbf16>
    %cst_61 = arith.constant dense<0.000000e+00> : vector<8x128xf32>
    %268 = tpu.matmul %267, %8, %cst_61 {dimension_numbers = #tpu.dot_dimension_numbers<[1], [0], [0], [1], [0, 0, 1, 1], [], []>} : vector<8x128xbf16>, vector<128x128xbf16>, vector<8x128xf32> -> vector<8x128xf32>
    %c0_62 = arith.constant 0 : index
    %c0_63 = arith.constant 0 : index
    %269 = vector.load %arg6[%c0_62, %c0_63] : memref<1x128xf32, #tpu.memory_space<vmem>>, vector<1x128xf32>
    %270 = vector.broadcast %269 : vector<1x128xf32> to vector<8x128xf32>
    %271 = arith.addf %268, %270 : vector<8x128xf32>
    %cst_64 = arith.constant 1.000000e+02 : f32
    %272 = vector.broadcast %cst_64 : f32 to vector<8x128xf32>
    %273 = arith.mulf %271, %272 : vector<8x128xf32>
    %c0_65 = arith.constant 0 : index
    %c0_66 = arith.constant 0 : index
    %274 = vector.load %arg7[%c0_65, %c0_66] : memref<8x128xf32, #tpu.memory_space<vmem>>, vector<8x128xf32>
    tpu.vector_store %arg7[%c0_65, %c0_66], %273 {strides = array<i32>} : memref<8x128xf32, #tpu.memory_space<vmem>>, vector<8x128xf32>,
    return
  }
  func.func @transform_0(%arg0: i32) -> (i32, i32) {
    %c0_i32 = arith.constant 0 : i32
    %c0_i32_0 = arith.constant 0 : i32
    %c0_i32_1 = arith.constant 0 : i32
    return %c0_i32, %c0_i32_0 : i32, i32
  }
  func.func @transform_1(%arg0: i32) -> (i32, i32) {
    %c0_i32 = arith.constant 0 : i32
    %c0_i32_0 = arith.constant 0 : i32
    %c0_i32_1 = arith.constant 0 : i32
    return %c0_i32, %c0_i32_0 : i32, i32
  }
  func.func @transform_2(%arg0: i32) -> (i32, i32) {
    %c0_i32 = arith.constant 0 : i32
    %c0_i32_0 = arith.constant 0 : i32
    %c0_i32_1 = arith.constant 0 : i32
    return %c0_i32, %c0_i32_0 : i32, i32
  }
  func.func @transform_3(%arg0: i32) -> (i32, i32) {
    %c0_i32 = arith.constant 0 : i32
    %c0_i32_0 = arith.constant 0 : i32
    %c0_i32_1 = arith.constant 0 : i32
    return %c0_i32, %c0_i32_0 : i32, i32
  }
  func.func @transform_4(%arg0: i32) -> (i32, i32) {
    %c0_i32 = arith.constant 0 : i32
    %c0_i32_0 = arith.constant 0 : i32
    %c0_i32_1 = arith.constant 0 : i32
    return %c0_i32, %c0_i32_0 : i32, i32
  }
  func.func @transform_5(%arg0: i32) -> (i32, i32) {
    %c0_i32 = arith.constant 0 : i32
    %c0_i32_0 = arith.constant 0 : i32
    %c0_i32_1 = arith.constant 0 : i32
    return %c0_i32, %c0_i32_0 : i32, i32
  }
  func.func @transform_6(%arg0: i32) -> (i32, i32) {
    %c0_i32 = arith.constant 0 : i32
    %c0_i32_0 = arith.constant 0 : i32
    %c0_i32_1 = arith.constant 0 : i32
    return %c0_i32, %c0_i32_0 : i32, i32
  }
}

</mosaic_0001>

<llo_original>
// kernel: tpu_custom_call.1
$region0: #{tpu_custom_call.1}
  #allocation0 [shape = 'u32[]', space=smem, size = 0x4, offset = 0x4, fixed_abs, tag = 'smem constant byte address 0x4 - core index']
  #allocation1 [shape = 'u32[144,128]{1,0:T(1,128)}', space=vmem, size = 0x12000, scoped, tag = 'internal scratch']
  #allocation2 [shape = 'f32[64,512]{1,0:T(8,128)}', space=vmem, size = 0x20000, scoped, tag = 'scratch operand']
  %s0 = inlined_call_operand.vmem [shape: bf16[64,16], index: 0, kind: input, shape index: {}]
  %s1 = inlined_call_operand.vmem [shape: bf16[16,512], index: 1, kind: input, shape index: {}]
  %s2 = inlined_call_operand.hbm [shape: bf16[128,512], index: 2, kind: input, shape index: {}]
  %s3 = inlined_call_operand.vmem [shape: f32[1,512], index: 3, kind: input, shape index: {}]
  %s4 = inlined_call_operand.hbm [shape: bf16[128,128], index: 4, kind: input, shape index: {}]
  %s5 = inlined_call_operand.vmem [shape: f32[1,128], index: 5, kind: input, shape index: {}]
  %s6 = inlined_call_operand.hbm [shape: f32[8,128], index: 6, kind: output, shape index: {}]
  %s7 = sld [smem:[#allocation0]]
  $region42: #{tpu_custom_call.1} parent=0
    _
  %s9 = ssub.s32 1, %s7
  %s10 = scalar_select 0, %s9, %s7
  $region1: #{tpu_custom_call.1} parent=0
    #allocation3 [shape = 'u8[131072]{0}', space=vmem, size = 0x20000, scoped, tag = 'input window, operand 2, single buffered']
    #allocation4 [shape = 's32[1]{0}', space=sflag, size = 0x4, scoped, tag = 'scoped memory for tpu_custom_call.1']
    #allocation5 [shape = 's32[1]{0}', space=sflag, size = 0x4, scoped, tag = 'scoped memory for tpu_custom_call.1']
    #allocation6 [shape = 'u8[32768]{0}', space=vmem, size = 0x8000, scoped, tag = 'input window, operand 4, single buffered']
    #allocation7 [shape = 's32[1]{0}', space=sflag, size = 0x4, scoped, tag = 'scoped memory for tpu_custom_call.1']
    #allocation8 [shape = 'u8[4096]{0}', space=vmem, size = 0x1000, scoped, tag = 'output window, operand 0, single buffered']
    %11 = vsyncpa [#allocation4], 0
    %12 = vsyncpa [#allocation7], 0
    %13 = vsyncpa [#allocation5], 0
    // Predicated region
    $region2: #{tpu_custom_call.1} parent=1 // pred_check
      _
    $region3: #{tpu_custom_call.1} parent=1 // pred_check_branch
      %15 = sbr.rel (0) target = $region5
    $region4: #{tpu_custom_call.1} parent=1 // pred_region
      _
    $region5: #{tpu_custom_call.1} parent=1 // pred_fallthru
      _
    // Predicated region
    $region6: #{tpu_custom_call.1} parent=1 // pred_check
      _
    $region7: #{tpu_custom_call.1} parent=1 // pred_check_branch
      %17 = sbr.rel (0) target = $region9
    $region8: #{tpu_custom_call.1} parent=1 // pred_region
      _
    $region9: #{tpu_custom_call.1} parent=1 // pred_fallthru
      _
    // Predicated region
    $region10: #{tpu_custom_call.1} parent=1 // pred_check
      _
    $region11: #{tpu_custom_call.1} parent=1 // pred_check_branch
      %19 = sbr.rel (0) target = $region13
    $region12: #{tpu_custom_call.1} parent=1 // pred_region
      %s21 = ssub.s32 4096, 4096
      %22 = vsyncadd [#allocation4], %s21
      %s23 = sshll.u32 [#allocation3], 4
      %s24 = int_to_ptr.vmem [resolvable:$true] %s23
      %29 = dma.hbm_to_vmem [thread:$0]  %s2, 4096, %s24, [#allocation4], 256, 256, 16
    $region13: #{tpu_custom_call.1} parent=1 // pred_fallthru
      _
    // Predicated region
    $region14: #{tpu_custom_call.1} parent=1 // pred_check
      _
    $region15: #{tpu_custom_call.1} parent=1 // pred_check_branch
      %31 = sbr.rel (0) target = $region17
    $region16: #{tpu_custom_call.1} parent=1 // pred_region
      _
    $region17: #{tpu_custom_call.1} parent=1 // pred_fallthru
      _
    // Predicated region
    $region18: #{tpu_custom_call.1} parent=1 // pred_check
      _
    $region19: #{tpu_custom_call.1} parent=1 // pred_check_branch
      %33 = sbr.rel (0) target = $region21
    $region20: #{tpu_custom_call.1} parent=1 // pred_region
      %s35 = ssub.s32 1024, 1024
      %36 = vsyncadd [#allocation7], %s35
      %s37 = sshll.u32 [#allocation6], 4
      %s38 = int_to_ptr.vmem [resolvable:$true] %s37
      %43 = dma.hbm_to_vmem [thread:$0]  %s4, 1024, %s38, [#allocation7], 64, 64, 4
    $region21: #{tpu_custom_call.1} parent=1 // pred_fallthru
      _
    // Predicated region
    $region22: #{tpu_custom_call.1} parent=1 // pred_check
      _
    $region23: #{tpu_custom_call.1} parent=1 // pred_check_branch
      %45 = sbr.rel (0) target = $region25
    $region24: #{tpu_custom_call.1} parent=1 // pred_region
      _
    $region25: #{tpu_custom_call.1} parent=1 // pred_fallthru
      _
    // Predicated region
    $region26: #{tpu_custom_call.1} parent=1 // pred_check
      _
    $region27: #{tpu_custom_call.1} parent=1 // pred_check_branch
      %47 = sbr.rel (0) target = $region29
    $region28: #{tpu_custom_call.1} parent=1 // pred_region
      %48 = dma.done [#allocation4], 4096
    $region29: #{tpu_custom_call.1} parent=1 // pred_fallthru
      _
    // Predicated region
    $region30: #{tpu_custom_call.1} parent=1 // pred_check
      _
    $region31: #{tpu_custom_call.1} parent=1 // pred_check_branch
      %50 = sbr.rel (0) target = $region33
    $region32: #{tpu_custom_call.1} parent=1 // pred_region
      %51 = dma.done [#allocation7], 1024
    $region33: #{tpu_custom_call.1} parent=1 // pred_fallthru
      _
    %v53 = vld [vmem:[%s0] sm:$0xf]
    %v54 = vld [vmem:[%s0 + $0x4] sm:$0xf]
    %v55 = vld [vmem:[%s0 + $0x8] sm:$0xf]
    %v56 = vld [vmem:[%s0 + $0xc] sm:$0xf]
    %v57 = vld [vmem:[%s0 + $0x10] sm:$0xf]
    %v58 = vld [vmem:[%s0 + $0x14] sm:$0xf]
    %v59 = vld [vmem:[%s0 + $0x18] sm:$0xf]
    %v60 = vld [vmem:[%s0 + $0x1c] sm:$0xf]
    %v61 = vld [vmem:[%s1] sm:$0xff]
    %v62 = vld [vmem:[%s1 + $0x8] sm:$0xff]
    %v63 = vld [vmem:[%s1 + $0x10] sm:$0xff]
    %v64 = vld [vmem:[%s1 + $0x18] sm:$0xff]
    %v65 = vld [vmem:[%s3] sm:$0xf]
    %v67 = vlaneseq
    %v68 = vshrl.u32 %v67, 7
    %v69 = vsub.s32 0, %v68
    %v70 = vrot.slane %v65, %v69
    %v71 = vlaneseq
    %v72 = vshrl.u32 %v71, 7
    %v73 = vsub.s32 1, %v72
    %v74 = vrot.slane %v65, %v73
    %v75 = vlaneseq
    %v76 = vshrl.u32 %v75, 7
    %v77 = vsub.s32 2, %v76
    %v78 = vrot.slane %v65, %v77
    %v79 = vlaneseq
    %v80 = vshrl.u32 %v79, 7
    %v81 = vsub.s32 3, %v80
    %v82 = vrot.slane %v65, %v81
    %v95 = vunpack.c.l.b16 %v53
    %v96 = vunpack.c.l.b16 %v54
    %v97 = vunpack.c.l.b16 %v55
    %v98 = vunpack.c.l.b16 %v56
    %v99 = vunpack.c.l.b16 %v57
    %v100 = vunpack.c.l.b16 %v58
    %v101 = vunpack.c.l.b16 %v59
    %v102 = vunpack.c.l.b16 %v60
    %v103 = vpack.c.b16 %v96, %v95
    %v104 = vpack.c.b16 %v98, %v97
    %v105 = vpack.c.b16 %v100, %v99
    %v106 = vpack.c.b16 %v102, %v101
    %v111 = vunpack.c.l.b16 %v61
    %v112 = vunpack.c.h.b16 %v61
    %v113 = vunpack.c.l.b16 %v62
    %v114 = vunpack.c.h.b16 %v62
    %v115 = vunpack.c.l.b16 %v63
    %v116 = vunpack.c.h.b16 %v63
    %v117 = vunpack.c.l.b16 %v64
    %v118 = vunpack.c.h.b16 %v64
    %v119 = vpack.c.b16 %v115, %v111
    %v120 = vpack.c.b16 %v116, %v112
    %v121 = vpack.c.b16 %v117, %v113
    %v122 = vpack.c.b16 %v118, %v114
    %vm127 = vcmask 130048
    %v129 = vsel %vm127, %v103, 0
    %v132 = vsel %vm127, %v104, 0
    %v135 = vsel %vm127, %v105, 0
    %v138 = vsel %vm127, %v106, 0
    %140 = vmatprep.subr.bf16.mxu0 0
    %141 = vmatpush1.bf16.msra.mxu0 0
    %142 = vmatprep.subr.bf16.mxu0 0
    %143 = vmatpush1.bf16.msra.mxu0 0
    %144 = vmatprep.subr.bf16.mxu0 0
    %145 = vmatpush1.bf16.msra.mxu0 0
    %146 = vmatprep.subr.bf16.mxu0 0
    %147 = vmatpush1.bf16.msra.mxu0 0
    %148 = vmatprep.subr.bf16.mxu0 0
    %149 = vmatpush1.bf16.msra.mxu0 0
    %150 = vmatprep.subr.bf16.mxu0 0
    %151 = vmatpush1.bf16.msra.mxu0 0
    %152 = vmatprep.subr.bf16.mxu0 0
    %153 = vmatpush1.bf16.msra.mxu0 0
    %154 = vmatprep.subr.bf16.mxu0 %v120
    %155 = vmatpush1.bf16.msra.mxu0 %v119
    %156 = vmatprep.subr.bf16.mxu0 0
    %157 = vmatpush2.bf16.msra.mxu0 0
    %158 = vmatprep.subr.bf16.mxu0 0
    %159 = vmatpush2.bf16.msra.mxu0 0
    %160 = vmatprep.subr.bf16.mxu0 0
    %161 = vmatpush2.bf16.msra.mxu0 0
    %162 = vmatprep.subr.bf16.mxu0 0
    %163 = vmatpush2.bf16.msra.mxu0 0
    %164 = vmatprep.subr.bf16.mxu0 0
    %165 = vmatpush2.bf16.msra.mxu0 0
    %166 = vmatprep.subr.bf16.mxu0 0
    %167 = vmatpush2.bf16.msra.mxu0 0
    %168 = vmatprep.subr.bf16.mxu0 0
    %169 = vmatpush2.bf16.msra.mxu0 0
    %170 = vmatprep.subr.bf16.mxu0 0
    %171 = vmatpush2.bf16.msra.mxu0 0
    %172 = vmatprep.mubr.bf16.mxu0 0
    %173 = vmatmul.mubr.bf16.gmra.mxu0 %v129
    %v174 = vpop.f32.mrf.mxu0
    %v175 = vadd.f32 %v70, %v174
    %v176 = vpop.f32.mrf.mxu0
    %v177 = vadd.f32 %v74, %v176
    %v178 = vpop.f32.mrf.mxu0
    %v179 = vadd.f32 %v70, %v178
    %v180 = vpop.f32.mrf.mxu0
    %v181 = vadd.f32 %v74, %v180
    %182 = vmatprep.mubr.bf16.mxu0 0
    %183 = vmatmul.mubr.bf16.gmra.mxu0 %v132
    %v184 = vpop.f32.mrf.mxu0
    %v185 = vadd.f32 %v70, %v184
    %v186 = vpop.f32.mrf.mxu0
    %v187 = vadd.f32 %v74, %v186
    %v188 = vpop.f32.mrf.mxu0
    %v189 = vadd.f32 %v70, %v188
    %v190 = vpop.f32.mrf.mxu0
    %v191 = vadd.f32 %v74, %v190
    %192 = vmatprep.mubr.bf16.mxu0 0
    %193 = vmatmul.mubr.bf16.gmra.mxu0 %v135
    %v194 = vpop.f32.mrf.mxu0
    %v195 = vadd.f32 %v70, %v194
    %v196 = vpop.f32.mrf.mxu0
    %v197 = vadd.f32 %v74, %v196
    %v198 = vpop.f32.mrf.mxu0
    %v199 = vadd.f32 %v70, %v198
    %v200 = vpop.f32.mrf.mxu0
    %v201 = vadd.f32 %v74, %v200
    %202 = vmatprep.mubr.bf16.mxu0 0
    %203 = vmatmul.mubr.bf16.gmra.mxu0 %v138
    %v204 = vpop.f32.mrf.mxu0
    %v205 = vadd.f32 %v70, %v204
    %v206 = vpop.f32.mrf.mxu0
    %v207 = vadd.f32 %v74, %v206
    %v208 = vpop.f32.mrf.mxu0
    %v209 = vadd.f32 %v70, %v208
    %v210 = vpop.f32.mrf.mxu0
    %v211 = vadd.f32 %v74, %v210
    %212 = vdwg.mxu0
    %213 = vmatprep.subr.bf16.mxu0 0
    %214 = vmatpush1.bf16.msra.mxu0 0
    %215 = vmatprep.subr.bf16.mxu0 0
    %216 = vmatpush1.bf16.msra.mxu0 0
    %217 = vmatprep.subr.bf16.mxu0 0
    %218 = vmatpush1.bf16.msra.mxu0 0
    %219 = vmatprep.subr.bf16.mxu0 0
    %220 = vmatpush1.bf16.msra.mxu0 0
    %221 = vmatprep.subr.bf16.mxu0 0
    %222 = vmatpush1.bf16.msra.mxu0 0
    %223 = vmatprep.subr.bf16.mxu0 0
    %224 = vmatpush1.bf16.msra.mxu0 0
    %225 = vmatprep.subr.bf16.mxu0 0
    %226 = vmatpush1.bf16.msra.mxu0 0
    %227 = vmatprep.subr.bf16.mxu0 %v122
    %228 = vmatpush1.bf16.msra.mxu0 %v121
    %229 = vmatprep.subr.bf16.mxu0 0
    %230 = vmatpush2.bf16.msra.mxu0 0
    %231 = vmatprep.subr.bf16.mxu0 0
    %232 = vmatpush2.bf16.msra.mxu0 0
    %233 = vmatprep.subr.bf16.mxu0 0
    %234 = vmatpush2.bf16.msra.mxu0 0
    %235 = vmatprep.subr.bf16.mxu0 0
    %236 = vmatpush2.bf16.msra.mxu0 0
    %237 = vmatprep.subr.bf16.mxu0 0
    %238 = vmatpush2.bf16.msra.mxu0 0
    %239 = vmatprep.subr.bf16.mxu0 0
    %240 = vmatpush2.bf16.msra.mxu0 0
    %241 = vmatprep.subr.bf16.mxu0 0
    %242 = vmatpush2.bf16.msra.mxu0 0
    %243 = vmatprep.subr.bf16.mxu0 0
    %244 = vmatpush2.bf16.msra.mxu0 0
    %245 = vmatprep.mubr.bf16.mxu0 0
    %246 = vmatmul.mubr.bf16.gmra.mxu0 %v129
    %v247 = vpop.f32.mrf.mxu0
    %v248 = vadd.f32 %v78, %v247
    %v249 = vpop.f32.mrf.mxu0
    %v250 = vadd.f32 %v82, %v249
    %v251 = vpop.f32.mrf.mxu0
    %v252 = vadd.f32 %v78, %v251
    %v253 = vpop.f32.mrf.mxu0
    %v254 = vadd.f32 %v82, %v253
    %255 = vmatprep.mubr.bf16.mxu0 0
    %256 = vmatmul.mubr.bf16.gmra.mxu0 %v132
    %v257 = vpop.f32.mrf.mxu0
    %v258 = vadd.f32 %v78, %v257
    %v259 = vpop.f32.mrf.mxu0
    %v260 = vadd.f32 %v82, %v259
    %v261 = vpop.f32.mrf.mxu0
    %v262 = vadd.f32 %v78, %v261
    %v263 = vpop.f32.mrf.mxu0
    %v264 = vadd.f32 %v82, %v263
    %265 = vmatprep.mubr.bf16.mxu0 0
    %266 = vmatmul.mubr.bf16.gmra.mxu0 %v135
    %v267 = vpop.f32.mrf.mxu0
    %v268 = vadd.f32 %v78, %v267
    %v269 = vpop.f32.mrf.mxu0
    %v270 = vadd.f32 %v82, %v269
    %v271 = vpop.f32.mrf.mxu0
    %v272 = vadd.f32 %v78, %v271
    %v273 = vpop.f32.mrf.mxu0
    %v274 = vadd.f32 %v82, %v273
    %275 = vmatprep.mubr.bf16.mxu0 0
    %276 = vmatmul.mubr.bf16.gmra.mxu0 %v138
    %v277 = vpop.f32.mrf.mxu0
    %v278 = vadd.f32 %v78, %v277
    %v279 = vpop.f32.mrf.mxu0
    %v280 = vadd.f32 %v82, %v279
    %v281 = vpop.f32.mrf.mxu0
    %v282 = vadd.f32 %v78, %v281
    %v283 = vpop.f32.mrf.mxu0
    %v284 = vadd.f32 %v82, %v283
    %285 = vdwg.mxu0
    %286 = vst [vmem:[#allocation2] sm:$0xff] %v175
    %287 = vst [vmem:[#allocation2 + $0x8] sm:$0xff] %v177
    %288 = vst [vmem:[#allocation2 + $0x10] sm:$0xff] %v248
    %289 = vst [vmem:[#allocation2 + $0x18] sm:$0xff] %v250
    %290 = vst [vmem:[#allocation2 + $0x20] sm:$0xff] %v179
    %291 = vst [vmem:[#allocation2 + $0x28] sm:$0xff] %v181
    %292 = vst [vmem:[#allocation2 + $0x30] sm:$0xff] %v252
    %293 = vst [vmem:[#allocation2 + $0x38] sm:$0xff] %v254
    %294 = vst [vmem:[#allocation2 + $0x40] sm:$0xff] %v185
    %295 = vst [vmem:[#allocation2 + $0x48] sm:$0xff] %v187
    %296 = vst [vmem:[#allocation2 + $0x50] sm:$0xff] %v258
    %297 = vst [vmem:[#allocation2 + $0x58] sm:$0xff] %v260
    %298 = vst [vmem:[#allocation2 + $0x60] sm:$0xff] %v189
    %299 = vst [vmem:[#allocation2 + $0x68] sm:$0xff] %v191
    %300 = vst [vmem:[#allocation2 + $0x70] sm:$0xff] %v262
    %301 = vst [vmem:[#allocation2 + $0x78] sm:$0xff] %v264
    %302 = vst [vmem:[#allocation2 + $0x80] sm:$0xff] %v195
    %303 = vst [vmem:[#allocation2 + $0x88] sm:$0xff] %v197
    %304 = vst [vmem:[#allocation2 + $0x90] sm:$0xff] %v268
    %305 = vst [vmem:[#allocation2 + $0x98] sm:$0xff] %v270
    %306 = vst [vmem:[#allocation2 + $0xa0] sm:$0xff] %v199
    %307 = vst [vmem:[#allocation2 + $0xa8] sm:$0xff] %v201
    %308 = vst [vmem:[#allocation2 + $0xb0] sm:$0xff] %v272
    %309 = vst [vmem:[#allocation2 + $0xb8] sm:$0xff] %v274
    %310 = vst [vmem:[#allocation2 + $0xc0] sm:$0xff] %v205
    %311 = vst [vmem:[#allocation2 + $0xc8] sm:$0xff] %v207
    %312 = vst [vmem:[#allocation2 + $0xd0] sm:$0xff] %v278
    %313 = vst [vmem:[#allocation2 + $0xd8] sm:$0xff] %v280
    %314 = vst [vmem:[#allocation2 + $0xe0] sm:$0xff] %v209
    %315 = vst [vmem:[#allocation2 + $0xe8] sm:$0xff] %v211
    %316 = vst [vmem:[#allocation2 + $0xf0] sm:$0xff] %v282
    %317 = vst [vmem:[#allocation2 + $0xf8] sm:$0xff] %v284
    %v318 = vld [vmem:[#allocation3] sm:$0xff]
    %v319 = vld [vmem:[#allocation3 + $0x8] sm:$0xff]
    %v320 = vld [vmem:[#allocation3 + $0x10] sm:$0xff]
    %v321 = vld [vmem:[#allocation3 + $0x18] sm:$0xff]
    %v322 = vld [vmem:[#allocation3 + $0x20] sm:$0xff]
    %v323 = vld [vmem:[#allocation3 + $0x28] sm:$0xff]
    %v324 = vld [vmem:[#allocation3 + $0x30] sm:$0xff]
    %v325 = vld [vmem:[#allocation3 + $0x38] sm:$0xff]
    %v326 = vld [vmem:[#allocation3 + $0x40] sm:$0xff]
    %v327 = vld [vmem:[#allocation3 + $0x48] sm:$0xff]
    %v328 = vld [vmem:[#allocation3 + $0x50] sm:$0xff]
    %v329 = vld [vmem:[#allocation3 + $0x58] sm:$0xff]
    %v330 = vld [vmem:[#allocation3 + $0x60] sm:$0xff]
    %v331 = vld [vmem:[#allocation3 + $0x68] sm:$0xff]
    %v332 = vld [vmem:[#allocation3 + $0x70] sm:$0xff]
    %v333 = vld [vmem:[#allocation3 + $0x78] sm:$0xff]
    %v334 = vld [vmem:[#allocation3 + $0x80] sm:$0xff]
    %v335 = vld [vmem:[#allocation3 + $0x88] sm:$0xff]
    %v336 = vld [vmem:[#allocation3 + $0x90] sm:$0xff]
    %v337 = vld [vmem:[#allocation3 + $0x98] sm:$0xff]
    %v338 = vld [vmem:[#allocation3 + $0xa0] sm:$0xff]
    %v339 = vld [vmem:[#allocation3 + $0xa8] sm:$0xff]
    %v340 = vld [vmem:[#allocation3 + $0xb0] sm:$0xff]
    %v341 = vld [vmem:[#allocation3 + $0xb8] sm:$0xff]
    %v342 = vld [vmem:[#allocation3 + $0xc0] sm:$0xff]
    %v343 = vld [vmem:[#allocation3 + $0xc8] sm:$0xff]
    %v344 = vld [vmem:[#allocation3 + $0xd0] sm:$0xff]
    %v345 = vld [vmem:[#allocation3 + $0xd8] sm:$0xff]
    %v346 = vld [vmem:[#allocation3 + $0xe0] sm:$0xff]
    %v347 = vld [vmem:[#allocation3 + $0xe8] sm:$0xff]
    %v348 = vld [vmem:[#allocation3 + $0xf0] sm:$0xff]
    %v349 = vld [vmem:[#allocation3 + $0xf8] sm:$0xff]
    %v350 = vld [vmem:[#allocation6] sm:$0xf]
    %v351 = vld [vmem:[#allocation6 + $0x4] sm:$0xf]
    %v352 = vld [vmem:[#allocation6 + $0x8] sm:$0xf]
    %v353 = vld [vmem:[#allocation6 + $0xc] sm:$0xf]
    %v354 = vld [vmem:[#allocation6 + $0x10] sm:$0xf]
    %v355 = vld [vmem:[#allocation6 + $0x14] sm:$0xf]
    %v356 = vld [vmem:[#allocation6 + $0x18] sm:$0xf]
    %v357 = vld [vmem:[#allocation6 + $0x1c] sm:$0xf]
    %v358 = vld [vmem:[#allocation6 + $0x20] sm:$0xf]
    %v359 = vld [vmem:[#allocation6 + $0x24] sm:$0xf]
    %v360 = vld [vmem:[#allocation6 + $0x28] sm:$0xf]
    %v361 = vld [vmem:[#allocation6 + $0x2c] sm:$0xf]
    %v362 = vld [vmem:[#allocation6 + $0x30] sm:$0xf]
    %v363 = vld [vmem:[#allocation6 + $0x34] sm:$0xf]
    %v364 = vld [vmem:[#allocation6 + $0x38] sm:$0xf]
    %v365 = vld [vmem:[#allocation6 + $0x3c] sm:$0xf]
    %s366 = smul.u32 0, 4
    %s367 = smul.addr %s366, 8
    %s368 = scalar_lea.vmem [#allocation2], %s367
    %v369 = vld [vmem:[%s368] sm:$0xff]
    %v370 = vld [vmem:[%s368 + $0x8] sm:$0xff]
    %v371 = vld [vmem:[%s368 + $0x10] sm:$0xff]
    %v372 = vld [vmem:[%s368 + $0x18] sm:$0xff]
    %v405 = vunpack.c.l.b16 %v318
    %v406 = vunpack.c.h.b16 %v318
    %v407 = vunpack.c.l.b16 %v319
    %v408 = vunpack.c.h.b16 %v319
    %v409 = vunpack.c.l.b16 %v320
    %v410 = vunpack.c.h.b16 %v320
    %v411 = vunpack.c.l.b16 %v321
    %v412 = vunpack.c.h.b16 %v321
    %v413 = vunpack.c.l.b16 %v322
    %v414 = vunpack.c.h.b16 %v322
    %v415 = vunpack.c.l.b16 %v323
    %v416 = vunpack.c.h.b16 %v323
    %v417 = vunpack.c.l.b16 %v324
    %v418 = vunpack.c.h.b16 %v324
    %v419 = vunpack.c.l.b16 %v325
    %v420 = vunpack.c.h.b16 %v325
    %v421 = vunpack.c.l.b16 %v326
    %v422 = vunpack.c.h.b16 %v326
    %v423 = vunpack.c.l.b16 %v327
    %v424 = vunpack.c.h.b16 %v327
    %v425 = vunpack.c.l.b16 %v328
    %v426 = vunpack.c.h.b16 %v328
    %v427 = vunpack.c.l.b16 %v329
    %v428 = vunpack.c.h.b16 %v329
    %v429 = vunpack.c.l.b16 %v330
    %v430 = vunpack.c.h.b16 %v330
    %v431 = vunpack.c.l.b16 %v331
    %v432 = vunpack.c.h.b16 %v331
    %v433 = vunpack.c.l.b16 %v332
    %v434 = vunpack.c.h.b16 %v332
    %v435 = vunpack.c.l.b16 %v333
    %v436 = vunpack.c.h.b16 %v333
    %v437 = vunpack.c.l.b16 %v334
    %v438 = vunpack.c.h.b16 %v334
    %v439 = vunpack.c.l.b16 %v335
    %v440 = vunpack.c.h.b16 %v335
    %v441 = vunpack.c.l.b16 %v336
    %v442 = vunpack.c.h.b16 %v336
    %v443 = vunpack.c.l.b16 %v337
    %v444 = vunpack.c.h.b16 %v337
    %v445 = vunpack.c.l.b16 %v338
    %v446 = vunpack.c.h.b16 %v338
    %v447 = vunpack.c.l.b16 %v339
    %v448 = vunpack.c.h.b16 %v339
    %v449 = vunpack.c.l.b16 %v340
    %v450 = vunpack.c.h.b16 %v340
    %v451 = vunpack.c.l.b16 %v341
    %v452 = vunpack.c.h.b16 %v341
    %v453 = vunpack.c.l.b16 %v342
    %v454 = vunpack.c.h.b16 %v342
    %v455 = vunpack.c.l.b16 %v343
    %v456 = vunpack.c.h.b16 %v343
    %v457 = vunpack.c.l.b16 %v344
    %v458 = vunpack.c.h.b16 %v344
    %v459 = vunpack.c.l.b16 %v345
    %v460 = vunpack.c.h.b16 %v345
    %v461 = vunpack.c.l.b16 %v346
    %v462 = vunpack.c.h.b16 %v346
    %v463 = vunpack.c.l.b16 %v347
    %v464 = vunpack.c.h.b16 %v347
    %v465 = vunpack.c.l.b16 %v348
    %v466 = vunpack.c.h.b16 %v348
    %v467 = vunpack.c.l.b16 %v349
    %v468 = vunpack.c.h.b16 %v349
    %v469 = vpack.c.b16 %v409, %v405
    %v470 = vpack.c.b16 %v410, %v406
    %v471 = vpack.c.b16 %v411, %v407
    %v472 = vpack.c.b16 %v412, %v408
    %v473 = vpack.c.b16 %v417, %v413
    %v474 = vpack.c.b16 %v418, %v414
    %v475 = vpack.c.b16 %v419, %v415
    %v476 = vpack.c.b16 %v420, %v416
    %v477 = vpack.c.b16 %v425, %v421
    %v478 = vpack.c.b16 %v426, %v422
    %v479 = vpack.c.b16 %v427, %v423
    %v480 = vpack.c.b16 %v428, %v424
    %v481 = vpack.c.b16 %v433, %v429
    %v482 = vpack.c.b16 %v434, %v430
    %v483 = vpack.c.b16 %v435, %v431
    %v484 = vpack.c.b16 %v436, %v432
    %v485 = vpack.c.b16 %v441, %v437
    %v486 = vpack.c.b16 %v442, %v438
    %v487 = vpack.c.b16 %v443, %v439
    %v488 = vpack.c.b16 %v444, %v440
    %v489 = vpack.c.b16 %v449, %v445
    %v490 = vpack.c.b16 %v450, %v446
    %v491 = vpack.c.b16 %v451, %v447
    %v492 = vpack.c.b16 %v452, %v448
    %v493 = vpack.c.b16 %v457, %v453
    %v494 = vpack.c.b16 %v458, %v454
    %v495 = vpack.c.b16 %v459, %v455
    %v496 = vpack.c.b16 %v460, %v456
    %v497 = vpack.c.b16 %v465, %v461
    %v498 = vpack.c.b16 %v466, %v462
    %v499 = vpack.c.b16 %v467, %v463
    %v500 = vpack.c.b16 %v468, %v464
    %533 = vmatprep.subr.bf16.mxu0 %v498
    %534 = vmatpush1.bf16.msra.mxu0 %v497
    %535 = vmatprep.subr.bf16.mxu0 %v494
    %536 = vmatpush1.bf16.msra.mxu0 %v493
    %537 = vmatprep.subr.bf16.mxu0 %v490
    %538 = vmatpush1.bf16.msra.mxu0 %v489
    %539 = vmatprep.subr.bf16.mxu0 %v486
    %540 = vmatpush1.bf16.msra.mxu0 %v485
    %541 = vmatprep.subr.bf16.mxu0 %v482
    %542 = vmatpush1.bf16.msra.mxu0 %v481
    %543 = vmatprep.subr.bf16.mxu0 %v478
    %544 = vmatpush1.bf16.msra.mxu0 %v477
    %545 = vmatprep.subr.bf16.mxu0 %v474
    %546 = vmatpush1.bf16.msra.mxu0 %v473
    %547 = vmatprep.subr.bf16.mxu0 %v470
    %548 = vmatpush1.bf16.msra.mxu0 %v469
    %549 = vmatprep.subr.bf16.mxu0 0
    %550 = vmatpush2.bf16.msra.mxu0 0
    %551 = vmatprep.subr.bf16.mxu0 0
    %552 = vmatpush2.bf16.msra.mxu0 0
    %553 = vmatprep.subr.bf16.mxu0 0
    %554 = vmatpush2.bf16.msra.mxu0 0
    %555 = vmatprep.subr.bf16.mxu0 0
    %556 = vmatpush2.bf16.msra.mxu0 0
    %557 = vmatprep.subr.bf16.mxu0 0
    %558 = vmatpush2.bf16.msra.mxu0 0
    %559 = vmatprep.subr.bf16.mxu0 0
    %560 = vmatpush2.bf16.msra.mxu0 0
    %561 = vmatprep.subr.bf16.mxu0 0
    %562 = vmatpush2.bf16.msra.mxu0 0
    %563 = vmatprep.subr.bf16.mxu0 0
    %564 = vmatpush2.bf16.msra.mxu0 0
    %565 = vmatprep.mubr.bf16.mxu0 0
    %566 = vmatmul.mubr.bf16.gmra.mxu0 0
    %v567 = vpop.f32.mrf.mxu0
    %v568 = vadd.f32 0.0, %v567
    %v569 = vpop.f32.mrf.mxu0
    %v570 = vadd.f32 0.0, %v569
    %v571 = vpop.f32.mrf.mxu0
    %v572 = vpop.f32.mrf.mxu0
    %573 = vdwg.mxu0
    %574 = vmatprep.subr.bf16.mxu0 %v500
    %575 = vmatpush1.bf16.msra.mxu0 %v499
    %576 = vmatprep.subr.bf16.mxu0 %v496
    %577 = vmatpush1.bf16.msra.mxu0 %v495
    %578 = vmatprep.subr.bf16.mxu0 %v492
    %579 = vmatpush1.bf16.msra.mxu0 %v491
    %580 = vmatprep.subr.bf16.mxu0 %v488
    %581 = vmatpush1.bf16.msra.mxu0 %v487
    %582 = vmatprep.subr.bf16.mxu0 %v484
    %583 = vmatpush1.bf16.msra.mxu0 %v483
    %584 = vmatprep.subr.bf16.mxu0 %v480
    %585 = vmatpush1.bf16.msra.mxu0 %v479
    %586 = vmatprep.subr.bf16.mxu0 %v476
    %587 = vmatpush1.bf16.msra.mxu0 %v475
    %588 = vmatprep.subr.bf16.mxu0 %v472
    %589 = vmatpush1.bf16.msra.mxu0 %v471
    %590 = vmatprep.subr.bf16.mxu0 0
    %591 = vmatpush2.bf16.msra.mxu0 0
    %592 = vmatprep.subr.bf16.mxu0 0
    %593 = vmatpush2.bf16.msra.mxu0 0
    %594 = vmatprep.subr.bf16.mxu0 0
    %595 = vmatpush2.bf16.msra.mxu0 0
    %596 = vmatprep.subr.bf16.mxu0 0
    %597 = vmatpush2.bf16.msra.mxu0 0
    %598 = vmatprep.subr.bf16.mxu0 0
    %599 = vmatpush2.bf16.msra.mxu0 0
    %600 = vmatprep.subr.bf16.mxu0 0
    %601 = vmatpush2.bf16.msra.mxu0 0
    %602 = vmatprep.subr.bf16.mxu0 0
    %603 = vmatpush2.bf16.msra.mxu0 0
    %604 = vmatprep.subr.bf16.mxu0 0
    %605 = vmatpush2.bf16.msra.mxu0 0
    %606 = vmatprep.mubr.bf16.mxu0 0
    %607 = vmatmul.mubr.bf16.gmra.mxu0 0
    %v608 = vpop.f32.mrf.mxu0
    %v609 = vadd.f32 0.0, %v608
    %v610 = vpop.f32.mrf.mxu0
    %v611 = vadd.f32 0.0, %v610
    %v612 = vpop.f32.mrf.mxu0
    %v613 = vpop.f32.mrf.mxu0
    %614 = vdwg.mxu0
    %v615 = vadd.f32 %v369, %v568
    %v616 = vadd.f32 %v370, %v570
    %v617 = vadd.f32 %v371, %v609
    %v618 = vadd.f32 %v372, %v611
    %v619 = vxor.u32 %v615, 2147483648
    %v620 = vmul.f32 %v619, 1.442695
    %v621 = vpow.pop %v620
    %v622 = vadd.f32 %v621, 1.0
    %v623 = vrcp.pop %v622
    %v624 = vmul.f32 1.0, %v623
    %v625 = vxor.u32 %v616, 2147483648
    %v626 = vmul.f32 %v625, 1.442695
    %v627 = vpow.pop %v626
    %v628 = vadd.f32 %v627, 1.0
    %v629 = vrcp.pop %v628
    %v630 = vmul.f32 1.0, %v629
    %v631 = vtanh.pop %v617
    %v632 = vxor.u32 %v618, 2147483648
    %v633 = vmul.f32 %v632, 1.442695
    %v634 = vpow.pop %v633
    %v635 = vadd.f32 %v634, 1.0
    %v636 = vrcp.pop %v635
    %v637 = vmul.f32 1.0, %v636
    %v638 = vmul.f32 %v630, 0.0
    %v639 = vmul.f32 %v624, %v631
    %v640 = vadd.f32 %v638, %v639
    %v641 = vtanh.pop %v640
    %v642 = vmul.f32 %v637, %v641
    %s643 = smul.u32 1, 4
    %s644 = smul.addr %s643, 8
    %s645 = scalar_lea.vmem [#allocation2], %s644
    %v646 = vld [vmem:[%s645] sm:$0xff]
    %v647 = vld [vmem:[%s645 + $0x8] sm:$0xff]
    %v648 = vld [vmem:[%s645 + $0x10] sm:$0xff]
    %v649 = vld [vmem:[%s645 + $0x18] sm:$0xff]
    %v650 = vpack.c.bf16 %v642, %v642
    %651 = vmatprep.subr.bf16.mxu0 %v498
    %652 = vmatpush1.bf16.msra.mxu0 %v497
    %653 = vmatprep.subr.bf16.mxu0 %v494
    %654 = vmatpush1.bf16.msra.mxu0 %v493
    %655 = vmatprep.subr.bf16.mxu0 %v490
    %656 = vmatpush1.bf16.msra.mxu0 %v489
    %657 = vmatprep.subr.bf16.mxu0 %v486
    %658 = vmatpush1.bf16.msra.mxu0 %v485
    %659 = vmatprep.subr.bf16.mxu0 %v482
    %660 = vmatpush1.bf16.msra.mxu0 %v481
    %661 = vmatprep.subr.bf16.mxu0 %v478
    %662 = vmatpush1.bf16.msra.mxu0 %v477
    %663 = vmatprep.subr.bf16.mxu0 %v474
    %664 = vmatpush1.bf16.msra.mxu0 %v473
    %665 = vmatprep.subr.bf16.mxu0 %v470
    %666 = vmatpush1.bf16.msra.mxu0 %v469
    %667 = vmatprep.subr.bf16.mxu0 0
    %668 = vmatpush2.bf16.msra.mxu0 0
    %669 = vmatprep.subr.bf16.mxu0 0
    %670 = vmatpush2.bf16.msra.mxu0 0
    %671 = vmatprep.subr.bf16.mxu0 0
    %672 = vmatpush2.bf16.msra.mxu0 0
    %673 = vmatprep.subr.bf16.mxu0 0
    %674 = vmatpush2.bf16.msra.mxu0 0
    %675 = vmatprep.subr.bf16.mxu0 0
    %676 = vmatpush2.bf16.msra.mxu0 0
    %677 = vmatprep.subr.bf16.mxu0 0
    %678 = vmatpush2.bf16.msra.mxu0 0
    %679 = vmatprep.subr.bf16.mxu0 0
    %680 = vmatpush2.bf16.msra.mxu0 0
    %681 = vmatprep.subr.bf16.mxu0 0
    %682 = vmatpush2.bf16.msra.mxu0 0
    %683 = vmatprep.mubr.bf16.mxu0 0
    %684 = vmatmul.mubr.bf16.gmra.mxu0 %v650
    %v685 = vpop.f32.mrf.mxu0
    %v686 = vadd.f32 0.0, %v685
    %v687 = vpop.f32.mrf.mxu0
    %v688 = vadd.f32 0.0, %v687
    %v689 = vpop.f32.mrf.mxu0
    %v690 = vpop.f32.mrf.mxu0
    %691 = vdwg.mxu0
    %692 = vmatprep.subr.bf16.mxu0 %v500
    %693 = vmatpush1.bf16.msra.mxu0 %v499
    %694 = vmatprep.subr.bf16.mxu0 %v496
    %695 = vmatpush1.bf16.msra.mxu0 %v495
    %696 = vmatprep.subr.bf16.mxu0 %v492
    %697 = vmatpush1.bf16.msra.mxu0 %v491
    %698 = vmatprep.subr.bf16.mxu0 %v488
    %699 = vmatpush1.bf16.msra.mxu0 %v487
    %700 = vmatprep.subr.bf16.mxu0 %v484
    %701 = vmatpush1.bf16.msra.mxu0 %v483
    %702 = vmatprep.subr.bf16.mxu0 %v480
    %703 = vmatpush1.bf16.msra.mxu0 %v479
    %704 = vmatprep.subr.bf16.mxu0 %v476
    %705 = vmatpush1.bf16.msra.mxu0 %v475
    %706 = vmatprep.subr.bf16.mxu0 %v472
    %707 = vmatpush1.bf16.msra.mxu0 %v471
    %708 = vmatprep.subr.bf16.mxu0 0
    %709 = vmatpush2.bf16.msra.mxu0 0
    %710 = vmatprep.subr.bf16.mxu0 0
    %711 = vmatpush2.bf16.msra.mxu0 0
    %712 = vmatprep.subr.bf16.mxu0 0
    %713 = vmatpush2.bf16.msra.mxu0 0
    %714 = vmatprep.subr.bf16.mxu0 0
    %715 = vmatpush2.bf16.msra.mxu0 0
    %716 = vmatprep.subr.bf16.mxu0 0
    %717 = vmatpush2.bf16.msra.mxu0 0
    %718 = vmatprep.subr.bf16.mxu0 0
    %719 = vmatpush2.bf16.msra.mxu0 0
    %720 = vmatprep.subr.bf16.mxu0 0
    %721 = vmatpush2.bf16.msra.mxu0 0
    %722 = vmatprep.subr.bf16.mxu0 0
    %723 = vmatpush2.bf16.msra.mxu0 0
    %724 = vmatprep.mubr.bf16.mxu0 0
    %725 = vmatmul.mubr.bf16.gmra.mxu0 %v650
    %v726 = vpop.f32.mrf.mxu0
    %v727 = vadd.f32 0.0, %v726
    %v728 = vpop.f32.mrf.mxu0
    %v729 = vadd.f32 0.0, %v728
    %v730 = vpop.f32.mrf.mxu0
    %v731 = vpop.f32.mrf.mxu0
    %732 = vdwg.mxu0
    %v733 = vadd.f32 %v646, %v686
    %v734 = vadd.f32 %v647, %v688
    %v735 = vadd.f32 %v648, %v727
    %v736 = vadd.f32 %v649, %v729
    %v737 = vxor.u32 %v733, 2147483648
    %v738 = vmul.f32 %v737, 1.442695
    %v739 = vpow.pop %v738
    %v740 = vadd.f32 %v739, 1.0
    %v741 = vrcp.pop %v740
    %v742 = vmul.f32 1.0, %v741
    %v743 = vxor.u32 %v734, 2147483648
    %v744 = vmul.f32 %v743, 1.442695
    %v745 = vpow.pop %v744
    %v746 = vadd.f32 %v745, 1.0
    %v747 = vrcp.pop %v746
    %v748 = vmul.f32 1.0, %v747
    %v749 = vtanh.pop %v735
    %v750 = vxor.u32 %v736, 2147483648
    %v751 = vmul.f32 %v750, 1.442695
    %v752 = vpow.pop %v751
    %v753 = vadd.f32 %v752, 1.0
    %v754 = vrcp.pop %v753
    %v755 = vmul.f32 1.0, %v754
    %v756 = vmul.f32 %v748, %v640
    %v757 = vmul.f32 %v742, %v749
    %v758 = vadd.f32 %v756, %v757
    %v759 = vtanh.pop %v758
    %v760 = vmul.f32 %v755, %v759
    %s761 = smul.u32 2, 4
    %s762 = smul.addr %s761, 8
    %s763 = scalar_lea.vmem [#allocation2], %s762
    %v764 = vld [vmem:[%s763] sm:$0xff]
    %v765 = vld [vmem:[%s763 + $0x8] sm:$0xff]
    %v766 = vld [vmem:[%s763 + $0x10] sm:$0xff]
    %v767 = vld [vmem:[%s763 + $0x18] sm:$0xff]
    %v768 = vpack.c.bf16 %v760, %v760
    %769 = vmatprep.subr.bf16.mxu0 %v498
    %770 = vmatpush1.bf16.msra.mxu0 %v497
    %771 = vmatprep.subr.bf16.mxu0 %v494
    %772 = vmatpush1.bf16.msra.mxu0 %v493
    %773 = vmatprep.subr.bf16.mxu0 %v490
    %774 = vmatpush1.bf16.msra.mxu0 %v489
    %775 = vmatprep.subr.bf16.mxu0 %v486
    %776 = vmatpush1.bf16.msra.mxu0 %v485
    %777 = vmatprep.subr.bf16.mxu0 %v482
    %778 = vmatpush1.bf16.msra.mxu0 %v481
    %779 = vmatprep.subr.bf16.mxu0 %v478
    %780 = vmatpush1.bf16.msra.mxu0 %v477
    %781 = vmatprep.subr.bf16.mxu0 %v474
    %782 = vmatpush1.bf16.msra.mxu0 %v473
    %783 = vmatprep.subr.bf16.mxu0 %v470
    %784 = vmatpush1.bf16.msra.mxu0 %v469
    %785 = vmatprep.subr.bf16.mxu0 0
    %786 = vmatpush2.bf16.msra.mxu0 0
    %787 = vmatprep.subr.bf16.mxu0 0
    %788 = vmatpush2.bf16.msra.mxu0 0
    %789 = vmatprep.subr.bf16.mxu0 0
    %790 = vmatpush2.bf16.msra.mxu0 0
    %791 = vmatprep.subr.bf16.mxu0 0
    %792 = vmatpush2.bf16.msra.mxu0 0
    %793 = vmatprep.subr.bf16.mxu0 0
    %794 = vmatpush2.bf16.msra.mxu0 0
    %795 = vmatprep.subr.bf16.mxu0 0
    %796 = vmatpush2.bf16.msra.mxu0 0
    %797 = vmatprep.subr.bf16.mxu0 0
    %798 = vmatpush2.bf16.msra.mxu0 0
    %799 = vmatprep.subr.bf16.mxu0 0
    %800 = vmatpush2.bf16.msra.mxu0 0
    %801 = vmatprep.mubr.bf16.mxu0 0
    %802 = vmatmul.mubr.bf16.gmra.mxu0 %v768
    %v803 = vpop.f32.mrf.mxu0
    %v804 = vadd.f32 0.0, %v803
    %v805 = vpop.f32.mrf.mxu0
    %v806 = vadd.f32 0.0, %v805
    %v807 = vpop.f32.mrf.mxu0
    %v808 = vpop.f32.mrf.mxu0
    %809 = vdwg.mxu0
    %810 = vmatprep.subr.bf16.mxu0 %v500
    %811 = vmatpush1.bf16.msra.mxu0 %v499
    %812 = vmatprep.subr.bf16.mxu0 %v496
    %813 = vmatpush1.bf16.msra.mxu0 %v495
    %814 = vmatprep.subr.bf16.mxu0 %v492
    %815 = vmatpush1.bf16.msra.mxu0 %v491
    %816 = vmatprep.subr.bf16.mxu0 %v488
    %817 = vmatpush1.bf16.msra.mxu0 %v487
    %818 = vmatprep.subr.bf16.mxu0 %v484
    %819 = vmatpush1.bf16.msra.mxu0 %v483
    %820 = vmatprep.subr.bf16.mxu0 %v480
    %821 = vmatpush1.bf16.msra.mxu0 %v479
    %822 = vmatprep.subr.bf16.mxu0 %v476
    %823 = vmatpush1.bf16.msra.mxu0 %v475
    %824 = vmatprep.subr.bf16.mxu0 %v472
    %825 = vmatpush1.bf16.msra.mxu0 %v471
    %826 = vmatprep.subr.bf16.mxu0 0
    %827 = vmatpush2.bf16.msra.mxu0 0
    %828 = vmatprep.subr.bf16.mxu0 0
    %829 = vmatpush2.bf16.msra.mxu0 0
    %830 = vmatprep.subr.bf16.mxu0 0
    %831 = vmatpush2.bf16.msra.mxu0 0
    %832 = vmatprep.subr.bf16.mxu0 0
    %833 = vmatpush2.bf16.msra.mxu0 0
    %834 = vmatprep.subr.bf16.mxu0 0
    %835 = vmatpush2.bf16.msra.mxu0 0
    %836 = vmatprep.subr.bf16.mxu0 0
    %837 = vmatpush2.bf16.msra.mxu0 0
    %838 = vmatprep.subr.bf16.mxu0 0
    %839 = vmatpush2.bf16.msra.mxu0 0
    %840 = vmatprep.subr.bf16.mxu0 0
    %841 = vmatpush2.bf16.msra.mxu0 0
    %842 = vmatprep.mubr.bf16.mxu0 0
    %843 = vmatmul.mubr.bf16.gmra.mxu0 %v768
    %v844 = vpop.f32.mrf.mxu0
    %v845 = vadd.f32 0.0, %v844
    %v846 = vpop.f32.mrf.mxu0
    %v847 = vadd.f32 0.0, %v846
    %v848 = vpop.f32.mrf.mxu0
    %v849 = vpop.f32.mrf.mxu0
    %850 = vdwg.mxu0
    %v851 = vadd.f32 %v764, %v804
    %v852 = vadd.f32 %v765, %v806
    %v853 = vadd.f32 %v766, %v845
    %v854 = vadd.f32 %v767, %v847
    %v855 = vxor.u32 %v851, 2147483648
    %v856 = vmul.f32 %v855, 1.442695
    %v857 = vpow.pop %v856
    %v858 = vadd.f32 %v857, 1.0
    %v859 = vrcp.pop %v858
    %v860 = vmul.f32 1.0, %v859
    %v861 = vxor.u32 %v852, 2147483648
    %v862 = vmul.f32 %v861, 1.442695
    %v863 = vpow.pop %v862
    %v864 = vadd.f32 %v863, 1.0
    %v865 = vrcp.pop %v864
    %v866 = vmul.f32 1.0, %v865
    %v867 = vtanh.pop %v853
    %v868 = vxor.u32 %v854, 2147483648
    %v869 = vmul.f32 %v868, 1.442695
    %v870 = vpow.pop %v869
    %v871 = vadd.f32 %v870, 1.0
    %v872 = vrcp.pop %v871
    %v873 = vmul.f32 1.0, %v872
    %v874 = vmul.f32 %v866, %v758
    %v875 = vmul.f32 %v860, %v867
    %v876 = vadd.f32 %v874, %v875
    %v877 = vtanh.pop %v876
    %v878 = vmul.f32 %v873, %v877
    %s879 = smul.u32 3, 4
    %s880 = smul.addr %s879, 8
    %s881 = scalar_lea.vmem [#allocation2], %s880
    %v882 = vld [vmem:[%s881] sm:$0xff]
    %v883 = vld [vmem:[%s881 + $0x8] sm:$0xff]
    %v884 = vld [vmem:[%s881 + $0x10] sm:$0xff]
    %v885 = vld [vmem:[%s881 + $0x18] sm:$0xff]
    %v886 = vpack.c.bf16 %v878, %v878
    %887 = vmatprep.subr.bf16.mxu0 %v498
    %888 = vmatpush1.bf16.msra.mxu0 %v497
    %889 = vmatprep.subr.bf16.mxu0 %v494
    %890 = vmatpush1.bf16.msra.mxu0 %v493
    %891 = vmatprep.subr.bf16.mxu0 %v490
    %892 = vmatpush1.bf16.msra.mxu0 %v489
    %893 = vmatprep.subr.bf16.mxu0 %v486
    %894 = vmatpush1.bf16.msra.mxu0 %v485
    %895 = vmatprep.subr.bf16.mxu0 %v482
    %896 = vmatpush1.bf16.msra.mxu0 %v481
    %897 = vmatprep.subr.bf16.mxu0 %v478
    %898 = vmatpush1.bf16.msra.mxu0 %v477
    %899 = vmatprep.subr.bf16.mxu0 %v474
    %900 = vmatpush1.bf16.msra.mxu0 %v473
    %901 = vmatprep.subr.bf16.mxu0 %v470
    %902 = vmatpush1.bf16.msra.mxu0 %v469
    %903 = vmatprep.subr.bf16.mxu0 0
    %904 = vmatpush2.bf16.msra.mxu0 0
    %905 = vmatprep.subr.bf16.mxu0 0
    %906 = vmatpush2.bf16.msra.mxu0 0
    %907 = vmatprep.subr.bf16.mxu0 0
    %908 = vmatpush2.bf16.msra.mxu0 0
    %909 = vmatprep.subr.bf16.mxu0 0
    %910 = vmatpush2.bf16.msra.mxu0 0
    %911 = vmatprep.subr.bf16.mxu0 0
    %912 = vmatpush2.bf16.msra.mxu0 0
    %913 = vmatprep.subr.bf16.mxu0 0
    %914 = vmatpush2.bf16.msra.mxu0 0
    %915 = vmatprep.subr.bf16.mxu0 0
    %916 = vmatpush2.bf16.msra.mxu0 0
    %917 = vmatprep.subr.bf16.mxu0 0
    %918 = vmatpush2.bf16.msra.mxu0 0
    %919 = vmatprep.mubr.bf16.mxu0 0
    %920 = vmatmul.mubr.bf16.gmra.mxu0 %v886
    %v921 = vpop.f32.mrf.mxu0
    %v922 = vadd.f32 0.0, %v921
    %v923 = vpop.f32.mrf.mxu0
    %v924 = vadd.f32 0.0, %v923
    %v925 = vpop.f32.mrf.mxu0
    %v926 = vpop.f32.mrf.mxu0
    %927 = vdwg.mxu0
    %928 = vmatprep.subr.bf16.mxu0 %v500
    %929 = vmatpush1.bf16.msra.mxu0 %v499
    %930 = vmatprep.subr.bf16.mxu0 %v496
    %931 = vmatpush1.bf16.msra.mxu0 %v495
    %932 = vmatprep.subr.bf16.mxu0 %v492
    %933 = vmatpush1.bf16.msra.mxu0 %v491
    %934 = vmatprep.subr.bf16.mxu0 %v488
    %935 = vmatpush1.bf16.msra.mxu0 %v487
    %936 = vmatprep.subr.bf16.mxu0 %v484
    %937 = vmatpush1.bf16.msra.mxu0 %v483
    %938 = vmatprep.subr.bf16.mxu0 %v480
    %939 = vmatpush1.bf16.msra.mxu0 %v479
    %940 = vmatprep.subr.bf16.mxu0 %v476
    %941 = vmatpush1.bf16.msra.mxu0 %v475
    %942 = vmatprep.subr.bf16.mxu0 %v472
    %943 = vmatpush1.bf16.msra.mxu0 %v471
    %944 = vmatprep.subr.bf16.mxu0 0
    %945 = vmatpush2.bf16.msra.mxu0 0
    %946 = vmatprep.subr.bf16.mxu0 0
    %947 = vmatpush2.bf16.msra.mxu0 0
    %948 = vmatprep.subr.bf16.mxu0 0
    %949 = vmatpush2.bf16.msra.mxu0 0
    %950 = vmatprep.subr.bf16.mxu0 0
    %951 = vmatpush2.bf16.msra.mxu0 0
    %952 = vmatprep.subr.bf16.mxu0 0
    %953 = vmatpush2.bf16.msra.mxu0 0
    %954 = vmatprep.subr.bf16.mxu0 0
    %955 = vmatpush2.bf16.msra.mxu0 0
    %956 = vmatprep.subr.bf16.mxu0 0
    %957 = vmatpush2.bf16.msra.mxu0 0
    %958 = vmatprep.subr.bf16.mxu0 0
    %959 = vmatpush2.bf16.msra.mxu0 0
    %960 = vmatprep.mubr.bf16.mxu0 0
    %961 = vmatmul.mubr.bf16.gmra.mxu0 %v886
    %v962 = vpop.f32.mrf.mxu0
    %v963 = vadd.f32 0.0, %v962
    %v964 = vpop.f32.mrf.mxu0
    %v965 = vadd.f32 0.0, %v964
    %v966 = vpop.f32.mrf.mxu0
    %v967 = vpop.f32.mrf.mxu0
    %968 = vdwg.mxu0
    %v969 = vadd.f32 %v882, %v922
    %v970 = vadd.f32 %v883, %v924
    %v971 = vadd.f32 %v884, %v963
    %v972 = vadd.f32 %v885, %v965
    %v973 = vxor.u32 %v969, 2147483648
    %v974 = vmul.f32 %v973, 1.442695
    %v975 = vpow.pop %v974
    %v976 = vadd.f32 %v975, 1.0
    %v977 = vrcp.pop %v976
    %v978 = vmul.f32 1.0, %v977
    %v979 = vxor.u32 %v970, 2147483648
    %v980 = vmul.f32 %v979, 1.442695
    %v981 = vpow.pop %v980
    %v982 = vadd.f32 %v981, 1.0
    %v983 = vrcp.pop %v982
    %v984 = vmul.f32 1.0, %v983
    %v985 = vtanh.pop %v971
    %v986 = vxor.u32 %v972, 2147483648
    %v987 = vmul.f32 %v986, 1.442695
    %v988 = vpow.pop %v987
    %v989 = vadd.f32 %v988, 1.0
    %v990 = vrcp.pop %v989
    %v991 = vmul.f32 1.0, %v990
    %v992 = vmul.f32 %v984, %v876
    %v993 = vmul.f32 %v978, %v985
    %v994 = vadd.f32 %v992, %v993
    %v995 = vtanh.pop %v994
    %v996 = vmul.f32 %v991, %v995
    %s997 = smul.u32 4, 4
    %s998 = smul.addr %s997, 8
    %s999 = scalar_lea.vmem [#allocation2], %s998
    %v1000 = vld [vmem:[%s999] sm:$0xff]
    %v1001 = vld [vmem:[%s999 + $0x8] sm:$0xff]
    %v1002 = vld [vmem:[%s999 + $0x10] sm:$0xff]
    %v1003 = vld [vmem:[%s999 + $0x18] sm:$0xff]
    %v1004 = vpack.c.bf16 %v996, %v996
    %1005 = vmatprep.subr.bf16.mxu0 %v498
    %1006 = vmatpush1.bf16.msra.mxu0 %v497
    %1007 = vmatprep.subr.bf16.mxu0 %v494
    %1008 = vmatpush1.bf16.msra.mxu0 %v493
    %1009 = vmatprep.subr.bf16.mxu0 %v490
    %1010 = vmatpush1.bf16.msra.mxu0 %v489
    %1011 = vmatprep.subr.bf16.mxu0 %v486
    %1012 = vmatpush1.bf16.msra.mxu0 %v485
    %1013 = vmatprep.subr.bf16.mxu0 %v482
    %1014 = vmatpush1.bf16.msra.mxu0 %v481
    %1015 = vmatprep.subr.bf16.mxu0 %v478
    %1016 = vmatpush1.bf16.msra.mxu0 %v477
    %1017 = vmatprep.subr.bf16.mxu0 %v474
    %1018 = vmatpush1.bf16.msra.mxu0 %v473
    %1019 = vmatprep.subr.bf16.mxu0 %v470
    %1020 = vmatpush1.bf16.msra.mxu0 %v469
    %1021 = vmatprep.subr.bf16.mxu0 0
    %1022 = vmatpush2.bf16.msra.mxu0 0
    %1023 = vmatprep.subr.bf16.mxu0 0
    %1024 = vmatpush2.bf16.msra.mxu0 0
    %1025 = vmatprep.subr.bf16.mxu0 0
    %1026 = vmatpush2.bf16.msra.mxu0 0
    %1027 = vmatprep.subr.bf16.mxu0 0
    %1028 = vmatpush2.bf16.msra.mxu0 0
    %1029 = vmatprep.subr.bf16.mxu0 0
    %1030 = vmatpush2.bf16.msra.mxu0 0
    %1031 = vmatprep.subr.bf16.mxu0 0
    %1032 = vmatpush2.bf16.msra.mxu0 0
    %1033 = vmatprep.subr.bf16.mxu0 0
    %1034 = vmatpush2.bf16.msra.mxu0 0
    %1035 = vmatprep.subr.bf16.mxu0 0
    %1036 = vmatpush2.bf16.msra.mxu0 0
    %1037 = vmatprep.mubr.bf16.mxu0 0
    %1038 = vmatmul.mubr.bf16.gmra.mxu0 %v1004
    %v1039 = vpop.f32.mrf.mxu0
    %v1040 = vadd.f32 0.0, %v1039
    %v1041 = vpop.f32.mrf.mxu0
    %v1042 = vadd.f32 0.0, %v1041
    %v1043 = vpop.f32.mrf.mxu0
    %v1044 = vpop.f32.mrf.mxu0
    %1045 = vdwg.mxu0
    %1046 = vmatprep.subr.bf16.mxu0 %v500
    %1047 = vmatpush1.bf16.msra.mxu0 %v499
    %1048 = vmatprep.subr.bf16.mxu0 %v496
    %1049 = vmatpush1.bf16.msra.mxu0 %v495
    %1050 = vmatprep.subr.bf16.mxu0 %v492
    %1051 = vmatpush1.bf16.msra.mxu0 %v491
    %1052 = vmatprep.subr.bf16.mxu0 %v488
    %1053 = vmatpush1.bf16.msra.mxu0 %v487
    %1054 = vmatprep.subr.bf16.mxu0 %v484
    %1055 = vmatpush1.bf16.msra.mxu0 %v483
    %1056 = vmatprep.subr.bf16.mxu0 %v480
    %1057 = vmatpush1.bf16.msra.mxu0 %v479
    %1058 = vmatprep.subr.bf16.mxu0 %v476
    %1059 = vmatpush1.bf16.msra.mxu0 %v475
    %1060 = vmatprep.subr.bf16.mxu0 %v472
    %1061 = vmatpush1.bf16.msra.mxu0 %v471
    %1062 = vmatprep.subr.bf16.mxu0 0
    %1063 = vmatpush2.bf16.msra.mxu0 0
    %1064 = vmatprep.subr.bf16.mxu0 0
    %1065 = vmatpush2.bf16.msra.mxu0 0
    %1066 = vmatprep.subr.bf16.mxu0 0
    %1067 = vmatpush2.bf16.msra.mxu0 0
    %1068 = vmatprep.subr.bf16.mxu0 0
    %1069 = vmatpush2.bf16.msra.mxu0 0
    %1070 = vmatprep.subr.bf16.mxu0 0
    %1071 = vmatpush2.bf16.msra.mxu0 0
    %1072 = vmatprep.subr.bf16.mxu0 0
    %1073 = vmatpush2.bf16.msra.mxu0 0
    %1074 = vmatprep.subr.bf16.mxu0 0
    %1075 = vmatpush2.bf16.msra.mxu0 0
    %1076 = vmatprep.subr.bf16.mxu0 0
    %1077 = vmatpush2.bf16.msra.mxu0 0
    %1078 = vmatprep.mubr.bf16.mxu0 0
    %1079 = vmatmul.mubr.bf16.gmra.mxu0 %v1004
    %v1080 = vpop.f32.mrf.mxu0
    %v1081 = vadd.f32 0.0, %v1080
    %v1082 = vpop.f32.mrf.mxu0
    %v1083 = vadd.f32 0.0, %v1082
    %v1084 = vpop.f32.mrf.mxu0
    %v1085 = vpop.f32.mrf.mxu0
    %1086 = vdwg.mxu0
    %v1087 = vadd.f32 %v1000, %v1040
    %v1088 = vadd.f32 %v1001, %v1042
    %v1089 = vadd.f32 %v1002, %v1081
    %v1090 = vadd.f32 %v1003, %v1083
    %v1091 = vxor.u32 %v1087, 2147483648
    %v1092 = vmul.f32 %v1091, 1.442695
    %v1093 = vpow.pop %v1092
    %v1094 = vadd.f32 %v1093, 1.0
    %v1095 = vrcp.pop %v1094
    %v1096 = vmul.f32 1.0, %v1095
    %v1097 = vxor.u32 %v1088, 2147483648
    %v1098 = vmul.f32 %v1097, 1.442695
    %v1099 = vpow.pop %v1098
    %v1100 = vadd.f32 %v1099, 1.0
    %v1101 = vrcp.pop %v1100
    %v1102 = vmul.f32 1.0, %v1101
    %v1103 = vtanh.pop %v1089
    %v1104 = vxor.u32 %v1090, 2147483648
    %v1105 = vmul.f32 %v1104, 1.442695
    %v1106 = vpow.pop %v1105
    %v1107 = vadd.f32 %v1106, 1.0
    %v1108 = vrcp.pop %v1107
    %v1109 = vmul.f32 1.0, %v1108
    %v1110 = vmul.f32 %v1102, %v994
    %v1111 = vmul.f32 %v1096, %v1103
    %v1112 = vadd.f32 %v1110, %v1111
    %v1113 = vtanh.pop %v1112
    %v1114 = vmul.f32 %v1109, %v1113
    %s1115 = smul.u32 5, 4
    %s1116 = smul.addr %s1115, 8
    %s1117 = scalar_lea.vmem [#allocation2], %s1116
    %v1118 = vld [vmem:[%s1117] sm:$0xff]
    %v1119 = vld [vmem:[%s1117 + $0x8] sm:$0xff]
    %v1120 = vld [vmem:[%s1117 + $0x10] sm:$0xff]
    %v1121 = vld [vmem:[%s1117 + $0x18] sm:$0xff]
    %v1122 = vpack.c.bf16 %v1114, %v1114
    %1123 = vmatprep.subr.bf16.mxu0 %v498
    %1124 = vmatpush1.bf16.msra.mxu0 %v497
    %1125 = vmatprep.subr.bf16.mxu0 %v494
    %1126 = vmatpush1.bf16.msra.mxu0 %v493
    %1127 = vmatprep.subr.bf16.mxu0 %v490
    %1128 = vmatpush1.bf16.msra.mxu0 %v489
    %1129 = vmatprep.subr.bf16.mxu0 %v486
    %1130 = vmatpush1.bf16.msra.mxu0 %v485
    %1131 = vmatprep.subr.bf16.mxu0 %v482
    %1132 = vmatpush1.bf16.msra.mxu0 %v481
    %1133 = vmatprep.subr.bf16.mxu0 %v478
    %1134 = vmatpush1.bf16.msra.mxu0 %v477
    %1135 = vmatprep.subr.bf16.mxu0 %v474
    %1136 = vmatpush1.bf16.msra.mxu0 %v473
    %1137 = vmatprep.subr.bf16.mxu0 %v470
    %1138 = vmatpush1.bf16.msra.mxu0 %v469
    %1139 = vmatprep.subr.bf16.mxu0 0
    %1140 = vmatpush2.bf16.msra.mxu0 0
    %1141 = vmatprep.subr.bf16.mxu0 0
    %1142 = vmatpush2.bf16.msra.mxu0 0
    %1143 = vmatprep.subr.bf16.mxu0 0
    %1144 = vmatpush2.bf16.msra.mxu0 0
    %1145 = vmatprep.subr.bf16.mxu0 0
    %1146 = vmatpush2.bf16.msra.mxu0 0
    %1147 = vmatprep.subr.bf16.mxu0 0
    %1148 = vmatpush2.bf16.msra.mxu0 0
    %1149 = vmatprep.subr.bf16.mxu0 0
    %1150 = vmatpush2.bf16.msra.mxu0 0
    %1151 = vmatprep.subr.bf16.mxu0 0
    %1152 = vmatpush2.bf16.msra.mxu0 0
    %1153 = vmatprep.subr.bf16.mxu0 0
    %1154 = vmatpush2.bf16.msra.mxu0 0
    %1155 = vmatprep.mubr.bf16.mxu0 0
    %1156 = vmatmul.mubr.bf16.gmra.mxu0 %v1122
    %v1157 = vpop.f32.mrf.mxu0
    %v1158 = vadd.f32 0.0, %v1157
    %v1159 = vpop.f32.mrf.mxu0
    %v1160 = vadd.f32 0.0, %v1159
    %v1161 = vpop.f32.mrf.mxu0
    %v1162 = vpop.f32.mrf.mxu0
    %1163 = vdwg.mxu0
    %1164 = vmatprep.subr.bf16.mxu0 %v500
    %1165 = vmatpush1.bf16.msra.mxu0 %v499
    %1166 = vmatprep.subr.bf16.mxu0 %v496
    %1167 = vmatpush1.bf16.msra.mxu0 %v495
    %1168 = vmatprep.subr.bf16.mxu0 %v492
    %1169 = vmatpush1.bf16.msra.mxu0 %v491
    %1170 = vmatprep.subr.bf16.mxu0 %v488
    %1171 = vmatpush1.bf16.msra.mxu0 %v487
    %1172 = vmatprep.subr.bf16.mxu0 %v484
    %1173 = vmatpush1.bf16.msra.mxu0 %v483
    %1174 = vmatprep.subr.bf16.mxu0 %v480
    %1175 = vmatpush1.bf16.msra.mxu0 %v479
    %1176 = vmatprep.subr.bf16.mxu0 %v476
    %1177 = vmatpush1.bf16.msra.mxu0 %v475
    %1178 = vmatprep.subr.bf16.mxu0 %v472
    %1179 = vmatpush1.bf16.msra.mxu0 %v471
    %1180 = vmatprep.subr.bf16.mxu0 0
    %1181 = vmatpush2.bf16.msra.mxu0 0
    %1182 = vmatprep.subr.bf16.mxu0 0
    %1183 = vmatpush2.bf16.msra.mxu0 0
    %1184 = vmatprep.subr.bf16.mxu0 0
    %1185 = vmatpush2.bf16.msra.mxu0 0
    %1186 = vmatprep.subr.bf16.mxu0 0
    %1187 = vmatpush2.bf16.msra.mxu0 0
    %1188 = vmatprep.subr.bf16.mxu0 0
    %1189 = vmatpush2.bf16.msra.mxu0 0
    %1190 = vmatprep.subr.bf16.mxu0 0
    %1191 = vmatpush2.bf16.msra.mxu0 0
    %1192 = vmatprep.subr.bf16.mxu0 0
    %1193 = vmatpush2.bf16.msra.mxu0 0
    %1194 = vmatprep.subr.bf16.mxu0 0
    %1195 = vmatpush2.bf16.msra.mxu0 0
    %1196 = vmatprep.mubr.bf16.mxu0 0
    %1197 = vmatmul.mubr.bf16.gmra.mxu0 %v1122
    %v1198 = vpop.f32.mrf.mxu0
    %v1199 = vadd.f32 0.0, %v1198
    %v1200 = vpop.f32.mrf.mxu0
    %v1201 = vadd.f32 0.0, %v1200
    %v1202 = vpop.f32.mrf.mxu0
    %v1203 = vpop.f32.mrf.mxu0
    %1204 = vdwg.mxu0
    %v1205 = vadd.f32 %v1118, %v1158
    %v1206 = vadd.f32 %v1119, %v1160
    %v1207 = vadd.f32 %v1120, %v1199
    %v1208 = vadd.f32 %v1121, %v1201
    %v1209 = vxor.u32 %v1205, 2147483648
    %v1210 = vmul.f32 %v1209, 1.442695
    %v1211 = vpow.pop %v1210
    %v1212 = vadd.f32 %v1211, 1.0
    %v1213 = vrcp.pop %v1212
    %v1214 = vmul.f32 1.0, %v1213
    %v1215 = vxor.u32 %v1206, 2147483648
    %v1216 = vmul.f32 %v1215, 1.442695
    %v1217 = vpow.pop %v1216
    %v1218 = vadd.f32 %v1217, 1.0
    %v1219 = vrcp.pop %v1218
    %v1220 = vmul.f32 1.0, %v1219
    %v1221 = vtanh.pop %v1207
    %v1222 = vxor.u32 %v1208, 2147483648
    %v1223 = vmul.f32 %v1222, 1.442695
    %v1224 = vpow.pop %v1223
    %v1225 = vadd.f32 %v1224, 1.0
    %v1226 = vrcp.pop %v1225
    %v1227 = vmul.f32 1.0, %v1226
    %v1228 = vmul.f32 %v1220, %v1112
    %v1229 = vmul.f32 %v1214, %v1221
    %v1230 = vadd.f32 %v1228, %v1229
    %v1231 = vtanh.pop %v1230
    %v1232 = vmul.f32 %v1227, %v1231
    %s1233 = smul.u32 6, 4
    %s1234 = smul.addr %s1233, 8
    %s1235 = scalar_lea.vmem [#allocation2], %s1234
    %v1236 = vld [vmem:[%s1235] sm:$0xff]
    %v1237 = vld [vmem:[%s1235 + $0x8] sm:$0xff]
    %v1238 = vld [vmem:[%s1235 + $0x10] sm:$0xff]
    %v1239 = vld [vmem:[%s1235 + $0x18] sm:$0xff]
    %v1240 = vpack.c.bf16 %v1232, %v1232
    %1241 = vmatprep.subr.bf16.mxu0 %v498
    %1242 = vmatpush1.bf16.msra.mxu0 %v497
    %1243 = vmatprep.subr.bf16.mxu0 %v494
    %1244 = vmatpush1.bf16.msra.mxu0 %v493
    %1245 = vmatprep.subr.bf16.mxu0 %v490
    %1246 = vmatpush1.bf16.msra.mxu0 %v489
    %1247 = vmatprep.subr.bf16.mxu0 %v486
    %1248 = vmatpush1.bf16.msra.mxu0 %v485
    %1249 = vmatprep.subr.bf16.mxu0 %v482
    %1250 = vmatpush1.bf16.msra.mxu0 %v481
    %1251 = vmatprep.subr.bf16.mxu0 %v478
    %1252 = vmatpush1.bf16.msra.mxu0 %v477
    %1253 = vmatprep.subr.bf16.mxu0 %v474
    %1254 = vmatpush1.bf16.msra.mxu0 %v473
    %1255 = vmatprep.subr.bf16.mxu0 %v470
    %1256 = vmatpush1.bf16.msra.mxu0 %v469
    %1257 = vmatprep.subr.bf16.mxu0 0
    %1258 = vmatpush2.bf16.msra.mxu0 0
    %1259 = vmatprep.subr.bf16.mxu0 0
    %1260 = vmatpush2.bf16.msra.mxu0 0
    %1261 = vmatprep.subr.bf16.mxu0 0
    %1262 = vmatpush2.bf16.msra.mxu0 0
    %1263 = vmatprep.subr.bf16.mxu0 0
    %1264 = vmatpush2.bf16.msra.mxu0 0
    %1265 = vmatprep.subr.bf16.mxu0 0
    %1266 = vmatpush2.bf16.msra.mxu0 0
    %1267 = vmatprep.subr.bf16.mxu0 0
    %1268 = vmatpush2.bf16.msra.mxu0 0
    %1269 = vmatprep.subr.bf16.mxu0 0
    %1270 = vmatpush2.bf16.msra.mxu0 0
    %1271 = vmatprep.subr.bf16.mxu0 0
    %1272 = vmatpush2.bf16.msra.mxu0 0
    %1273 = vmatprep.mubr.bf16.mxu0 0
    %1274 = vmatmul.mubr.bf16.gmra.mxu0 %v1240
    %v1275 = vpop.f32.mrf.mxu0
    %v1276 = vadd.f32 0.0, %v1275
    %v1277 = vpop.f32.mrf.mxu0
    %v1278 = vadd.f32 0.0, %v1277
    %v1279 = vpop.f32.mrf.mxu0
    %v1280 = vpop.f32.mrf.mxu0
    %1281 = vdwg.mxu0
    %1282 = vmatprep.subr.bf16.mxu0 %v500
    %1283 = vmatpush1.bf16.msra.mxu0 %v499
    %1284 = vmatprep.subr.bf16.mxu0 %v496
    %1285 = vmatpush1.bf16.msra.mxu0 %v495
    %1286 = vmatprep.subr.bf16.mxu0 %v492
    %1287 = vmatpush1.bf16.msra.mxu0 %v491
    %1288 = vmatprep.subr.bf16.mxu0 %v488
    %1289 = vmatpush1.bf16.msra.mxu0 %v487
    %1290 = vmatprep.subr.bf16.mxu0 %v484
    %1291 = vmatpush1.bf16.msra.mxu0 %v483
    %1292 = vmatprep.subr.bf16.mxu0 %v480
    %1293 = vmatpush1.bf16.msra.mxu0 %v479
    %1294 = vmatprep.subr.bf16.mxu0 %v476
    %1295 = vmatpush1.bf16.msra.mxu0 %v475
    %1296 = vmatprep.subr.bf16.mxu0 %v472
    %1297 = vmatpush1.bf16.msra.mxu0 %v471
    %1298 = vmatprep.subr.bf16.mxu0 0
    %1299 = vmatpush2.bf16.msra.mxu0 0
    %1300 = vmatprep.subr.bf16.mxu0 0
    %1301 = vmatpush2.bf16.msra.mxu0 0
    %1302 = vmatprep.subr.bf16.mxu0 0
    %1303 = vmatpush2.bf16.msra.mxu0 0
    %1304 = vmatprep.subr.bf16.mxu0 0
    %1305 = vmatpush2.bf16.msra.mxu0 0
    %1306 = vmatprep.subr.bf16.mxu0 0
    %1307 = vmatpush2.bf16.msra.mxu0 0
    %1308 = vmatprep.subr.bf16.mxu0 0
    %1309 = vmatpush2.bf16.msra.mxu0 0
    %1310 = vmatprep.subr.bf16.mxu0 0
    %1311 = vmatpush2.bf16.msra.mxu0 0
    %1312 = vmatprep.subr.bf16.mxu0 0
    %1313 = vmatpush2.bf16.msra.mxu0 0
    %1314 = vmatprep.mubr.bf16.mxu0 0
    %1315 = vmatmul.mubr.bf16.gmra.mxu0 %v1240
    %v1316 = vpop.f32.mrf.mxu0
    %v1317 = vadd.f32 0.0, %v1316
    %v1318 = vpop.f32.mrf.mxu0
    %v1319 = vadd.f32 0.0, %v1318
    %v1320 = vpop.f32.mrf.mxu0
    %v1321 = vpop.f32.mrf.mxu0
    %1322 = vdwg.mxu0
    %v1323 = vadd.f32 %v1236, %v1276
    %v1324 = vadd.f32 %v1237, %v1278
    %v1325 = vadd.f32 %v1238, %v1317
    %v1326 = vadd.f32 %v1239, %v1319
    %v1327 = vxor.u32 %v1323, 2147483648
    %v1328 = vmul.f32 %v1327, 1.442695
    %v1329 = vpow.pop %v1328
    %v1330 = vadd.f32 %v1329, 1.0
    %v1331 = vrcp.pop %v1330
    %v1332 = vmul.f32 1.0, %v1331
    %v1333 = vxor.u32 %v1324, 2147483648
    %v1334 = vmul.f32 %v1333, 1.442695
    %v1335 = vpow.pop %v1334
    %v1336 = vadd.f32 %v1335, 1.0
    %v1337 = vrcp.pop %v1336
    %v1338 = vmul.f32 1.0, %v1337
    %v1339 = vtanh.pop %v1325
    %v1340 = vxor.u32 %v1326, 2147483648
    %v1341 = vmul.f32 %v1340, 1.442695
    %v1342 = vpow.pop %v1341
    %v1343 = vadd.f32 %v1342, 1.0
    %v1344 = vrcp.pop %v1343
    %v1345 = vmul.f32 1.0, %v1344
    %v1346 = vmul.f32 %v1338, %v1230
    %v1347 = vmul.f32 %v1332, %v1339
    %v1348 = vadd.f32 %v1346, %v1347
    %v1349 = vtanh.pop %v1348
    %v1350 = vmul.f32 %v1345, %v1349
    %s1351 = smul.u32 7, 4
    %s1352 = smul.addr %s1351, 8
    %s1353 = scalar_lea.vmem [#allocation2], %s1352
    %v1354 = vld [vmem:[%s1353] sm:$0xff]
    %v1355 = vld [vmem:[%s1353 + $0x8] sm:$0xff]
    %v1356 = vld [vmem:[%s1353 + $0x10] sm:$0xff]
    %v1357 = vld [vmem:[%s1353 + $0x18] sm:$0xff]
    %v1358 = vpack.c.bf16 %v1350, %v1350
    %1359 = vmatprep.subr.bf16.mxu0 %v498
    %1360 = vmatpush1.bf16.msra.mxu0 %v497
    %1361 = vmatprep.subr.bf16.mxu0 %v494
    %1362 = vmatpush1.bf16.msra.mxu0 %v493
    %1363 = vmatprep.subr.bf16.mxu0 %v490
    %1364 = vmatpush1.bf16.msra.mxu0 %v489
    %1365 = vmatprep.subr.bf16.mxu0 %v486
    %1366 = vmatpush1.bf16.msra.mxu0 %v485
    %1367 = vmatprep.subr.bf16.mxu0 %v482
    %1368 = vmatpush1.bf16.msra.mxu0 %v481
    %1369 = vmatprep.subr.bf16.mxu0 %v478
    %1370 = vmatpush1.bf16.msra.mxu0 %v477
    %1371 = vmatprep.subr.bf16.mxu0 %v474
    %1372 = vmatpush1.bf16.msra.mxu0 %v473
    %1373 = vmatprep.subr.bf16.mxu0 %v470
    %1374 = vmatpush1.bf16.msra.mxu0 %v469
    %1375 = vmatprep.subr.bf16.mxu0 0
    %1376 = vmatpush2.bf16.msra.mxu0 0
    %1377 = vmatprep.subr.bf16.mxu0 0
    %1378 = vmatpush2.bf16.msra.mxu0 0
    %1379 = vmatprep.subr.bf16.mxu0 0
    %1380 = vmatpush2.bf16.msra.mxu0 0
    %1381 = vmatprep.subr.bf16.mxu0 0
    %1382 = vmatpush2.bf16.msra.mxu0 0
    %1383 = vmatprep.subr.bf16.mxu0 0
    %1384 = vmatpush2.bf16.msra.mxu0 0
    %1385 = vmatprep.subr.bf16.mxu0 0
    %1386 = vmatpush2.bf16.msra.mxu0 0
    %1387 = vmatprep.subr.bf16.mxu0 0
    %1388 = vmatpush2.bf16.msra.mxu0 0
    %1389 = vmatprep.subr.bf16.mxu0 0
    %1390 = vmatpush2.bf16.msra.mxu0 0
    %1391 = vmatprep.mubr.bf16.mxu0 0
    %1392 = vmatmul.mubr.bf16.gmra.mxu0 %v1358
    %v1393 = vpop.f32.mrf.mxu0
    %v1394 = vadd.f32 0.0, %v1393
    %v1395 = vpop.f32.mrf.mxu0
    %v1396 = vadd.f32 0.0, %v1395
    %v1397 = vpop.f32.mrf.mxu0
    %v1398 = vpop.f32.mrf.mxu0
    %1399 = vdwg.mxu0
    %1400 = vmatprep.subr.bf16.mxu0 %v500
    %1401 = vmatpush1.bf16.msra.mxu0 %v499
    %1402 = vmatprep.subr.bf16.mxu0 %v496
    %1403 = vmatpush1.bf16.msra.mxu0 %v495
    %1404 = vmatprep.subr.bf16.mxu0 %v492
    %1405 = vmatpush1.bf16.msra.mxu0 %v491
    %1406 = vmatprep.subr.bf16.mxu0 %v488
    %1407 = vmatpush1.bf16.msra.mxu0 %v487
    %1408 = vmatprep.subr.bf16.mxu0 %v484
    %1409 = vmatpush1.bf16.msra.mxu0 %v483
    %1410 = vmatprep.subr.bf16.mxu0 %v480
    %1411 = vmatpush1.bf16.msra.mxu0 %v479
    %1412 = vmatprep.subr.bf16.mxu0 %v476
    %1413 = vmatpush1.bf16.msra.mxu0 %v475
    %1414 = vmatprep.subr.bf16.mxu0 %v472
    %1415 = vmatpush1.bf16.msra.mxu0 %v471
    %1416 = vmatprep.subr.bf16.mxu0 0
    %1417 = vmatpush2.bf16.msra.mxu0 0
    %1418 = vmatprep.subr.bf16.mxu0 0
    %1419 = vmatpush2.bf16.msra.mxu0 0
    %1420 = vmatprep.subr.bf16.mxu0 0
    %1421 = vmatpush2.bf16.msra.mxu0 0
    %1422 = vmatprep.subr.bf16.mxu0 0
    %1423 = vmatpush2.bf16.msra.mxu0 0
    %1424 = vmatprep.subr.bf16.mxu0 0
    %1425 = vmatpush2.bf16.msra.mxu0 0
    %1426 = vmatprep.subr.bf16.mxu0 0
    %1427 = vmatpush2.bf16.msra.mxu0 0
    %1428 = vmatprep.subr.bf16.mxu0 0
    %1429 = vmatpush2.bf16.msra.mxu0 0
    %1430 = vmatprep.subr.bf16.mxu0 0
    %1431 = vmatpush2.bf16.msra.mxu0 0
    %1432 = vmatprep.mubr.bf16.mxu0 0
    %1433 = vmatmul.mubr.bf16.gmra.mxu0 %v1358
    %v1434 = vpop.f32.mrf.mxu0
    %v1435 = vadd.f32 0.0, %v1434
    %v1436 = vpop.f32.mrf.mxu0
    %v1437 = vadd.f32 0.0, %v1436
    %v1438 = vpop.f32.mrf.mxu0
    %v1439 = vpop.f32.mrf.mxu0
    %1440 = vdwg.mxu0
    %v1441 = vadd.f32 %v1354, %v1394
    %v1442 = vadd.f32 %v1355, %v1396
    %v1443 = vadd.f32 %v1356, %v1435
    %v1444 = vadd.f32 %v1357, %v1437
    %v1445 = vxor.u32 %v1441, 2147483648
    %v1446 = vmul.f32 %v1445, 1.442695
    %v1447 = vpow.pop %v1446
    %v1448 = vadd.f32 %v1447, 1.0
    %v1449 = vrcp.pop %v1448
    %v1450 = vmul.f32 1.0, %v1449
    %v1451 = vxor.u32 %v1442, 2147483648
    %v1452 = vmul.f32 %v1451, 1.442695
    %v1453 = vpow.pop %v1452
    %v1454 = vadd.f32 %v1453, 1.0
    %v1455 = vrcp.pop %v1454
    %v1456 = vmul.f32 1.0, %v1455
    %v1457 = vtanh.pop %v1443
    %v1458 = vxor.u32 %v1444, 2147483648
    %v1459 = vmul.f32 %v1458, 1.442695
    %v1460 = vpow.pop %v1459
    %v1461 = vadd.f32 %v1460, 1.0
    %v1462 = vrcp.pop %v1461
    %v1463 = vmul.f32 1.0, %v1462
    %v1464 = vmul.f32 %v1456, %v1348
    %v1465 = vmul.f32 %v1450, %v1457
    %v1466 = vadd.f32 %v1464, %v1465
    %v1467 = vtanh.pop %v1466
    %v1468 = vmul.f32 %v1463, %v1467
    %v1469 = vpack.c.bf16 %v1468, %v1468
    %v1470 = vld [vmem:[%s5] sm:$0x1]
    %v1472 = vlaneseq
    %v1473 = vshrl.u32 %v1472, 7
    %v1474 = vsub.s32 0, %v1473
    %v1475 = vrot.slane %v1470, %v1474
    %v1493 = vunpack.c.l.b16 %v350
    %v1494 = vunpack.c.l.b16 %v351
    %v1495 = vunpack.c.l.b16 %v352
    %v1496 = vunpack.c.l.b16 %v353
    %v1497 = vunpack.c.l.b16 %v354
    %v1498 = vunpack.c.l.b16 %v355
    %v1499 = vunpack.c.l.b16 %v356
    %v1500 = vunpack.c.l.b16 %v357
    %v1501 = vunpack.c.l.b16 %v358
    %v1502 = vunpack.c.l.b16 %v359
    %v1503 = vunpack.c.l.b16 %v360
    %v1504 = vunpack.c.l.b16 %v361
    %v1505 = vunpack.c.l.b16 %v362
    %v1506 = vunpack.c.l.b16 %v363
    %v1507 = vunpack.c.l.b16 %v364
    %v1508 = vunpack.c.l.b16 %v365
    %v1509 = vpack.c.b16 %v1494, %v1493
    %v1510 = vpack.c.b16 %v1496, %v1495
    %v1511 = vpack.c.b16 %v1498, %v1497
    %v1512 = vpack.c.b16 %v1500, %v1499
    %v1513 = vpack.c.b16 %v1502, %v1501
    %v1514 = vpack.c.b16 %v1504, %v1503
    %v1515 = vpack.c.b16 %v1506, %v1505
    %v1516 = vpack.c.b16 %v1508, %v1507
    %1525 = vmatprep.subr.bf16.mxu0 0
    %1526 = vmatpush1.bf16.msra.mxu0 %v1516
    %1527 = vmatprep.subr.bf16.mxu0 0
    %1528 = vmatpush1.bf16.msra.mxu0 %v1515
    %1529 = vmatprep.subr.bf16.mxu0 0
    %1530 = vmatpush1.bf16.msra.mxu0 %v1514
    %1531 = vmatprep.subr.bf16.mxu0 0
    %1532 = vmatpush1.bf16.msra.mxu0 %v1513
    %1533 = vmatprep.subr.bf16.mxu0 0
    %1534 = vmatpush1.bf16.msra.mxu0 %v1512
    %1535 = vmatprep.subr.bf16.mxu0 0
    %1536 = vmatpush1.bf16.msra.mxu0 %v1511
    %1537 = vmatprep.subr.bf16.mxu0 0
    %1538 = vmatpush1.bf16.msra.mxu0 %v1510
    %1539 = vmatprep.subr.bf16.mxu0 0
    %1540 = vmatpush1.bf16.msra.mxu0 %v1509
    %1541 = vmatprep.subr.bf16.mxu0 0
    %1542 = vmatpush2.bf16.msra.mxu0 0
    %1543 = vmatprep.subr.bf16.mxu0 0
    %1544 = vmatpush2.bf16.msra.mxu0 0
    %1545 = vmatprep.subr.bf16.mxu0 0
    %1546 = vmatpush2.bf16.msra.mxu0 0
    %1547 = vmatprep.subr.bf16.mxu0 0
    %1548 = vmatpush2.bf16.msra.mxu0 0
    %1549 = vmatprep.subr.bf16.mxu0 0
    %1550 = vmatpush2.bf16.msra.mxu0 0
    %1551 = vmatprep.subr.bf16.mxu0 0
    %1552 = vmatpush2.bf16.msra.mxu0 0
    %1553 = vmatprep.subr.bf16.mxu0 0
    %1554 = vmatpush2.bf16.msra.mxu0 0
    %1555 = vmatprep.subr.bf16.mxu0 0
    %1556 = vmatpush2.bf16.msra.mxu0 0
    %1557 = vmatprep.mubr.bf16.mxu0 0
    %1558 = vmatmul.mubr.bf16.gmra.mxu0 %v1469
    %v1559 = vpop.f32.mrf.mxu0
    %v1560 = vadd.f32 %v1475, %v1559
    %v1561 = vpop.f32.mrf.mxu0
    %v1562 = vpop.f32.mrf.mxu0
    %v1563 = vpop.f32.mrf.mxu0
    %1564 = vdwg.mxu0
    %v1565 = vmul.f32 %v1560, 100.0
    %1566 = vst [vmem:[#allocation8] sm:$0xff] %v1565
    // Predicated region
    $region34: #{tpu_custom_call.1} parent=1 // pred_check
      _
    $region35: #{tpu_custom_call.1} parent=1 // pred_check_branch
      %1568 = sbr.rel (0) target = $region37
    $region36: #{tpu_custom_call.1} parent=1 // pred_region
      %s1570 = ssub.s32 128, 128
      %1571 = vsyncadd [#allocation5], %s1570
      %s1573 = sshll.u32 [#allocation8], 4
      %s1574 = int_to_ptr.vmem [resolvable:$true] %s1573
      %1576 = dma.vmem_to_hbm [thread:$0]  %s1574, 128, %s6, [#allocation5]
    $region37: #{tpu_custom_call.1} parent=1 // pred_fallthru
      _
    // Predicated region
    $region38: #{tpu_custom_call.1} parent=1 // pred_check
      _
    $region39: #{tpu_custom_call.1} parent=1 // pred_check_branch
      %1578 = sbr.rel (0) target = $region41
    $region40: #{tpu_custom_call.1} parent=1 // pred_region
      %1579 = dma.done [#allocation5], 128
    $region41: #{tpu_custom_call.1} parent=1 // pred_fallthru
      _
    %1580 = vsyncpa [#allocation4], 1
    %1581 = vsyncpa [#allocation7], 1
    %1582 = vsyncpa [#allocation5], 1

</llo_original>
